<compile_context>
chip_gen: v5e
topology: v5e:2x2
jax: 0.10.0
libtpu: 0.0.40
codegen_flags: <defaults>
</compile_context>

<pallas_src>
import functools
import math

import jax
import jax.numpy as jnp
from jax.experimental import pallas as pl
from jax.experimental.pallas import tpu as pltpu


# --------------------------------------------------------------------------
# helpers
# --------------------------------------------------------------------------
def _row_tile(m, max_rows=512):
    """Largest row tile <= max_rows that divides m and is a multiple of 8
    (or the full extent when m is small / awkward)."""
    if m <= max_rows:
        return m
    t = (max_rows // 8) * 8
    while t >= 8:
        if m % t == 0:
            return t
        t -= 8
    return m


# --------------------------------------------------------------------------
# Fused kernel: KV-proj (per batch) + Q-proj + MHA + out-proj + MLP + LN
# --------------------------------------------------------------------------
def _fused_kernel(*refs, nhead, scale, eps, panoptic_on, has_qpos, has_pos):
    it = iter(refs)
    tgt_ref = next(it)
    qpos_ref = next(it) if has_qpos else None
    mem_ref = next(it)
    pos_ref = next(it) if has_pos else None
    wq_ref, bq_ref = next(it), next(it)
    wk_ref, bk_ref = next(it), next(it)
    wv_ref, bv_ref = next(it), next(it)
    wo_ref, bo_ref = next(it), next(it)
    wm_ref, bm_ref = next(it), next(it)
    g_ref, beta_ref = next(it), next(it)
    o_ref = next(it)
    k_sc, v_sc = next(it), next(it)

    lt = pl.program_id(1)

    # ---- K/V projection: once per batch (first q-tile), kept in bf16 VMEM ----
    @pl.when(lt == 0)
    def _():
        mem = mem_ref[0].astype(jnp.float32)                       # (S, d)
        if has_pos:
            kin = mem + pos_ref[0].astype(jnp.float32)
        else:
            kin = mem
        k = jnp.dot(kin.astype(jnp.bfloat16), wk_ref[...],
                    preferred_element_type=jnp.float32) + bk_ref[...]
        v = jnp.dot(mem.astype(jnp.bfloat16), wv_ref[...],
                    preferred_element_type=jnp.float32) + bv_ref[...]
        k_sc[...] = k.astype(jnp.bfloat16)
        v_sc[...] = v.astype(jnp.bfloat16)

    # ---- Q projection (query_pos add + scale fused, one pass over (tq, d)) ----
    x = tgt_ref[0].astype(jnp.float32)                             # residual input
    if has_qpos:
        qin = x + qpos_ref[0].astype(jnp.float32)
    else:
        qin = x
    q = jnp.dot(qin.astype(jnp.bfloat16), wq_ref[...],
                preferred_element_type=jnp.float32) + bq_ref[...]
    q = (q * scale).astype(jnp.bfloat16)                           # (tq, d) bf16

    kb = k_sc[...]                                                 # (S, d) bf16
    vb = v_sc[...]                                                 # (S, d) bf16

    d = q.shape[-1]
    hd = d // nhead
    outs = []
    for h in range(nhead):
        sl = slice(h * hd, (h + 1) * hd)
        qh, kh, vh = q[:, sl], kb[:, sl], vb[:, sl]
        # NT matmul: (tq, hd) x (S, hd) contracted on hd -> (tq, S)
        s = jax.lax.dot_general(qh, kh, (((1,), (1,)), ((), ())),
                                preferred_element_type=jnp.float32)
        m = jnp.max(s, axis=-1, keepdims=True)
        p = jnp.exp(s - m)
        denom = jnp.sum(p, axis=-1, keepdims=True)
        oh = jnp.dot(p.astype(jnp.bfloat16), vh,
                     preferred_element_type=jnp.float32)           # (tq, hd)
        # deferred softmax normalization (EUP reciprocal): O(tq*hd) not O(tq*S)
        outs.append(oh * pl.reciprocal(denom, approx=True))
    attn = jnp.concatenate(outs, axis=-1)                          # (tq, d) f32

    # ---- out-projection + MLP + residual + LayerNorm (never leaves VMEM) ----
    tgt2 = jnp.dot(attn.astype(jnp.bfloat16), wo_ref[...],
                   preferred_element_type=jnp.float32) + bo_ref[...]
    mlp = jnp.dot(tgt2.astype(jnp.bfloat16), wm_ref[...],
                  preferred_element_type=jnp.float32) + bm_ref[...]
    y = mlp if panoptic_on else (x + mlp)
    mean = jnp.mean(y, axis=-1, keepdims=True)
    diff = y - mean
    var = jnp.mean(diff * diff, axis=-1, keepdims=True)
    ln = diff * jax.lax.rsqrt(var + eps) * g_ref[...] + beta_ref[...]
    out = (x + ln) if panoptic_on else ln
    o_ref[0] = out.astype(o_ref.dtype)


# --------------------------------------------------------------------------
# Full forward
# --------------------------------------------------------------------------
def shortcut_cross_attention(tgt, memory, params, *, nhead,
                             pos=None, query_pos=None, panoptic_on=False,
                             max_q_rows=512, ln_eps=1e-5):
    """tgt: (L, N, d), memory: (S, N, d). Returns (L, N, d)."""
    L, N, d = tgt.shape
    S = memory.shape[0]
    assert d % nhead == 0
    scale = 1.0 / math.sqrt(d // nhead)
    tq = _row_tile(L, max_q_rows)

    # one seq-first -> batch-first transpose per input; transposed back once
    tgt_b = jnp.transpose(tgt, (1, 0, 2))
    mem_b = jnp.transpose(memory, (1, 0, 2))
    qpos_b = None if query_pos is None else jnp.transpose(query_pos, (1, 0, 2))
    pos_b = None if pos is None else jnp.transpose(pos, (1, 0, 2))

    bf16, f32 = jnp.bfloat16, jnp.float32

    row_spec = pl.BlockSpec((1, tq, d), lambda n, lt: (n, lt, 0))
    mem_spec = pl.BlockSpec((1, S, d), lambda n, lt: (n, 0, 0))
    w_spec = pl.BlockSpec((d, d), lambda n, lt: (0, 0))
    b_spec = pl.BlockSpec((1, d), lambda n, lt: (0, 0))

    in_specs, args = [row_spec], [tgt_b]
    if qpos_b is not None:
        in_specs.append(row_spec)
        args.append(qpos_b)
    in_specs.append(mem_spec)
    args.append(mem_b)
    if pos_b is not None:
        in_specs.append(mem_spec)
        args.append(pos_b)

    def w(name):  # MXU operands in bf16 (f32 accumulation in-kernel)
        return params[name].astype(bf16)

    def b(name):  # biases / LN affine stay f32
        return params[name].reshape(1, d).astype(f32)

    for spec, arr in [
        (w_spec, w("w_q")), (b_spec, b("b_q")),
        (w_spec, w("w_k")), (b_spec, b("b_k")),
        (w_spec, w("w_v")), (b_spec, b("b_v")),
        (w_spec, w("w_o")), (b_spec, b("b_o")),
        (w_spec, w("w_mlp")), (b_spec, b("b_mlp")),
        (b_spec, b("ln_g")), (b_spec, b("ln_b")),
    ]:
        in_specs.append(spec)
        args.append(arr)

    kern = functools.partial(
        _fused_kernel, nhead=nhead, scale=scale, eps=ln_eps,
        panoptic_on=panoptic_on,
        has_qpos=qpos_b is not None, has_pos=pos_b is not None)

    # explicit scoped-VMEM budget (double-buffered blocks + bf16 K/V scratch)
    itemsize = jnp.dtype(tgt.dtype).itemsize
    n_seq = 1 + (1 if qpos_b is not None else 0)
    n_mem = 1 + (1 if pos_b is not None else 0)
    vmem_est = (
        2 * (n_seq + 1) * tq * d * itemsize        # tgt (+query_pos) in + out
        + 2 * n_mem * S * d * itemsize             # memory (+pos)
        + 2 * (5 * d * d * 2 + 7 * d * 4)          # weights (bf16) + biases (f32)
        + 2 * S * d * 2                            # K/V bf16 scratch
    )
    vmem_limit = int(min(max(2 * vmem_est + (4 << 20), 32 << 20), 100 << 20))

    out_b = pl.pallas_call(
        kern,
        out_shape=jax.ShapeDtypeStruct((N, L, d), tgt.dtype),
        grid=(N, L // tq),
        in_specs=in_specs,
        out_specs=pl.BlockSpec((1, tq, d), lambda n, lt: (n, lt, 0)),
        scratch_shapes=[pltpu.VMEM((S, d), jnp.bfloat16),   # K
                        pltpu.VMEM((S, d), jnp.bfloat16)],  # V
        compiler_params=pltpu.CompilerParams(
            # batch axis parallel (feeds both v7x TCs); q-tile axis must be
            # sequential because the K/V scratch is carried across it.
            dimension_semantics=("parallel", "arbitrary"),
            vmem_limit_bytes=vmem_limit),
    )(*args)

    return jnp.transpose(out_b, (1, 0, 2))


# --------------------------------------------------------------------------
# Pure-JAX reference (f32) for a sanity check
# --------------------------------------------------------------------------
def _reference(tgt, memory, params, *, nhead, pos, query_pos, panoptic_on):
    L, N, d = tgt.shape
    S = memory.shape[0]
    hd = d // nhead
    scale = 1.0 / math.sqrt(hd)
    qin = tgt if query_pos is None else tgt + query_pos
    kin = memory if pos is None else memory + pos
    qb = jnp.transpose(qin, (1, 0, 2)) @ params["w_q"] + params["b_q"]
    kb = jnp.transpose(kin, (1, 0, 2)) @ params["w_k"] + params["b_k"]
    vb = jnp.transpose(memory, (1, 0, 2)) @ params["w_v"] + params["b_v"]
    qh = qb.reshape(N, L, nhead, hd).transpose(0, 2, 1, 3) * scale
    kh = kb.reshape(N, S, nhead, hd).transpose(0, 2, 1, 3)
    vh = vb.reshape(N, S, nhead, hd).transpose(0, 2, 1, 3)
    p = jax.nn.softmax(jnp.einsum("nhld,nhsd->nhls", qh, kh), axis=-1)
    o = jnp.einsum("nhls,nhsd->nhld", p, vh).transpose(0, 2, 1, 3).reshape(N, L, d)
    tgt2 = o @ params["w_o"] + params["b_o"]
    mlp = tgt2 @ params["w_mlp"] + params["b_mlp"]
    xb = jnp.transpose(tgt, (1, 0, 2))

    def ln(y):
        mu = y.mean(-1, keepdims=True)
        var = ((y - mu) ** 2).mean(-1, keepdims=True)
        return (y - mu) / jnp.sqrt(var + 1e-5) * params["ln_g"] + params["ln_b"]

    out = xb + ln(mlp) if panoptic_on else ln(xb + mlp)
    return jnp.transpose(out, (1, 0, 2))


# --------------------------------------------------------------------------
# Deterministic parameter init (synthetic; mirrors module shapes)
# --------------------------------------------------------------------------
def init_params(key, d_model):
    def xavier(k, shape):
        bound = math.sqrt(6.0 / (shape[0] + shape[1]))
        return jax.random.uniform(k, shape, jnp.float32, -bound, bound)

    ks = jax.random.split(key, 6)
    return {
        # in_proj weights stored transposed as (d_in, d_out)
        "w_q": xavier(ks[0], (d_model, d_model)),
        "w_k": xavier(ks[1], (d_model, d_model)),
        "w_v": xavier(ks[2], (d_model, d_model)),
        "b_q": jnp.zeros((d_model,), jnp.float32),
        "b_k": jnp.zeros((d_model,), jnp.float32),
        "b_v": jnp.zeros((d_model,), jnp.float32),
        # out_proj
        "w_o": xavier(ks[3], (d_model, d_model)),
        "b_o": jnp.zeros((d_model,), jnp.float32),
        # MLP (nn.Linear(d, d))
        "w_mlp": xavier(ks[4], (d_model, d_model)),
        "b_mlp": jax.random.uniform(ks[5], (d_model,), jnp.float32,
                                    -1.0 / math.sqrt(d_model),
                                    1.0 / math.sqrt(d_model)),
        # LayerNorm
        "ln_g": jnp.ones((d_model,), jnp.float32),
        "ln_b": jnp.zeros((d_model,), jnp.float32),
    }


if __name__ == "__main__":
    d_model, nhead = 32, 4
    L, S, N = 8, 16, 2          # tgt seq, memory seq, batch

    key = jax.random.PRNGKey(0)
    kp, k1, k2, k3, k4 = jax.random.split(key, 5)
    params = init_params(kp, d_model)

    tgt = jax.random.normal(k1, (L, N, d_model), jnp.float32)
    memory = jax.random.normal(k2, (S, N, d_model), jnp.float32)
    query_pos = jax.random.normal(k3, (L, N, d_model), jnp.float32)
    pos = jax.random.normal(k4, (S, N, d_model), jnp.float32)

    out = shortcut_cross_attention(
        tgt, memory, params, nhead=nhead,
        pos=pos, query_pos=query_pos, panoptic_on=False,
    )
    out = jax.block_until_ready(out)
    assert out.shape == (L, N, d_model)

    # loose tolerance: bf16 MXU operands + approximate reciprocal vs f32 ref
    ref = _reference(tgt, memory, params, nhead=nhead,
                     pos=pos, query_pos=query_pos, panoptic_on=False)
    err = float(jnp.max(jnp.abs(out - ref)))
    assert err < 0.15, f"max abs err {err}"
    print("KERNEL_OK")
</pallas_src>

<mosaic_0001>
module attributes {stable_mosaic.version = 11 : i64} {
  func.func @_fused_kernel(%arg0: i32, %arg1: i32, %arg2: memref<1x8x32xf32, #tpu.memory_space<vmem>>, %arg3: memref<1x8x32xf32, #tpu.memory_space<vmem>>, %arg4: memref<1x16x32xf32, #tpu.memory_space<vmem>>, %arg5: memref<1x16x32xf32, #tpu.memory_space<vmem>>, %arg6: memref<32x32xbf16, #tpu.memory_space<vmem>>, %arg7: memref<1x32xf32, #tpu.memory_space<vmem>>, %arg8: memref<32x32xbf16, #tpu.memory_space<vmem>>, %arg9: memref<1x32xf32, #tpu.memory_space<vmem>>, %arg10: memref<32x32xbf16, #tpu.memory_space<vmem>>, %arg11: memref<1x32xf32, #tpu.memory_space<vmem>>, %arg12: memref<32x32xbf16, #tpu.memory_space<vmem>>, %arg13: memref<1x32xf32, #tpu.memory_space<vmem>>, %arg14: memref<32x32xbf16, #tpu.memory_space<vmem>>, %arg15: memref<1x32xf32, #tpu.memory_space<vmem>>, %arg16: memref<1x32xf32, #tpu.memory_space<vmem>>, %arg17: memref<1x32xf32, #tpu.memory_space<vmem>>, %arg18: memref<1x8x32xf32, #tpu.memory_space<vmem>>, %arg19: memref<16x32xbf16, #tpu.memory_space<vmem>>, %arg20: memref<16x32xbf16, #tpu.memory_space<vmem>>) attributes {dimension_semantics = [#tpu.dimension_semantics<parallel>, #tpu.dimension_semantics<arbitrary>], iteration_bounds = array<i64: 2, 1>, scalar_prefetch = 0 : i64, scratch_operands = 2 : i64, tpu.core_type = #tpu.core_type<tc>, window_params = [{transform_indices = @transform_0, window_bounds = array<i64: 1, 8, 32>}, {transform_indices = @transform_1, window_bounds = array<i64: 1, 8, 32>}, {transform_indices = @transform_2, window_bounds = array<i64: 1, 16, 32>}, {transform_indices = @transform_3, window_bounds = array<i64: 1, 16, 32>}, {pipeline_mode = #tpu.pipeline_mode<synchronous>, transform_indices = @transform_4, window_bounds = array<i64: 32, 32>}, {pipeline_mode = #tpu.pipeline_mode<synchronous>, transform_indices = @transform_5, window_bounds = array<i64: 1, 32>}, {pipeline_mode = #tpu.pipeline_mode<synchronous>, transform_indices = @transform_6, window_bounds = array<i64: 32, 32>}, {pipeline_mode = #tpu.pipeline_mode<synchronous>, transform_indices = @transform_7, window_bounds = array<i64: 1, 32>}, {pipeline_mode = #tpu.pipeline_mode<synchronous>, transform_indices = @transform_8, window_bounds = array<i64: 32, 32>}, {pipeline_mode = #tpu.pipeline_mode<synchronous>, transform_indices = @transform_9, window_bounds = array<i64: 1, 32>}, {pipeline_mode = #tpu.pipeline_mode<synchronous>, transform_indices = @transform_10, window_bounds = array<i64: 32, 32>}, {pipeline_mode = #tpu.pipeline_mode<synchronous>, transform_indices = @transform_11, window_bounds = array<i64: 1, 32>}, {pipeline_mode = #tpu.pipeline_mode<synchronous>, transform_indices = @transform_12, window_bounds = array<i64: 32, 32>}, {pipeline_mode = #tpu.pipeline_mode<synchronous>, transform_indices = @transform_13, window_bounds = array<i64: 1, 32>}, {pipeline_mode = #tpu.pipeline_mode<synchronous>, transform_indices = @transform_14, window_bounds = array<i64: 1, 32>}, {pipeline_mode = #tpu.pipeline_mode<synchronous>, transform_indices = @transform_15, window_bounds = array<i64: 1, 32>}, {transform_indices = @transform_16, window_bounds = array<i64: 1, 8, 32>}]} {
    %c0_i32 = arith.constant 0 : i32
    %0 = arith.cmpi eq, %arg1, %c0_i32 : i32
    %1 = arith.extui %0 : i1 to i32
    %c0_i32_0 = arith.constant 0 : i32
    %2 = arith.cmpi ne, %1, %c0_i32_0 : i32
    scf.if %2 {
      %c0_53 = arith.constant 0 : index
      %c0_54 = arith.constant 0 : index
      %c0_55 = arith.constant 0 : index
      %122 = vector.load %arg4[%c0_53, %c0_54, %c0_55] : memref<1x16x32xf32, #tpu.memory_space<vmem>>, vector<1x16x32xf32>
      %123 = vector.shape_cast %122 : vector<1x16x32xf32> to vector<16x32xf32>
      %c0_56 = arith.constant 0 : index
      %c0_57 = arith.constant 0 : index
      %c0_58 = arith.constant 0 : index
      %124 = vector.load %arg5[%c0_56, %c0_57, %c0_58] : memref<1x16x32xf32, #tpu.memory_space<vmem>>, vector<1x16x32xf32>
      %125 = vector.shape_cast %124 : vector<1x16x32xf32> to vector<16x32xf32>
      %126 = arith.addf %123, %125 : vector<16x32xf32>
      %127 = arith.truncf %126 : vector<16x32xf32> to vector<16x32xbf16>
      %c0_59 = arith.constant 0 : index
      %c0_60 = arith.constant 0 : index
      %128 = vector.load %arg8[%c0_59, %c0_60] : memref<32x32xbf16, #tpu.memory_space<vmem>>, vector<32x32xbf16>
      %cst_61 = arith.constant dense<0.000000e+00> : vector<16x32xf32>
      %129 = tpu.matmul %127, %128, %cst_61 {dimension_numbers = #tpu.dot_dimension_numbers<[1], [0], [0], [1], [0, 0, 1, 1], [], []>} : vector<16x32xbf16>, vector<32x32xbf16>, vector<16x32xf32> -> vector<16x32xf32>
      %c0_62 = arith.constant 0 : index
      %c0_63 = arith.constant 0 : index
      %130 = vector.load %arg9[%c0_62, %c0_63] : memref<1x32xf32, #tpu.memory_space<vmem>>, vector<1x32xf32>
      %131 = vector.broadcast %130 : vector<1x32xf32> to vector<16x32xf32>
      %132 = arith.addf %129, %131 : vector<16x32xf32>
      %133 = arith.truncf %123 : vector<16x32xf32> to vector<16x32xbf16>
      %c0_64 = arith.constant 0 : index
      %c0_65 = arith.constant 0 : index
      %134 = vector.load %arg10[%c0_64, %c0_65] : memref<32x32xbf16, #tpu.memory_space<vmem>>, vector<32x32xbf16>
      %cst_66 = arith.constant dense<0.000000e+00> : vector<16x32xf32>
      %135 = tpu.matmul %133, %134, %cst_66 {dimension_numbers = #tpu.dot_dimension_numbers<[1], [0], [0], [1], [0, 0, 1, 1], [], []>} : vector<16x32xbf16>, vector<32x32xbf16>, vector<16x32xf32> -> vector<16x32xf32>
      %c0_67 = arith.constant 0 : index
      %c0_68 = arith.constant 0 : index
      %136 = vector.load %arg11[%c0_67, %c0_68] : memref<1x32xf32, #tpu.memory_space<vmem>>, vector<1x32xf32>
      %137 = vector.broadcast %136 : vector<1x32xf32> to vector<16x32xf32>
      %138 = arith.addf %135, %137 : vector<16x32xf32>
      %139 = arith.truncf %132 : vector<16x32xf32> to vector<16x32xbf16>
      %c0_69 = arith.constant 0 : index
      %c0_70 = arith.constant 0 : index
      %140 = vector.load %arg19[%c0_69, %c0_70] : memref<16x32xbf16, #tpu.memory_space<vmem>>, vector<16x32xbf16>
      tpu.vector_store %arg19[%c0_69, %c0_70], %139 {strides = array<i32>} : memref<16x32xbf16, #tpu.memory_space<vmem>>, vector<16x32xbf16>,
      %141 = arith.truncf %138 : vector<16x32xf32> to vector<16x32xbf16>
      %c0_71 = arith.constant 0 : index
      %c0_72 = arith.constant 0 : index
      %142 = vector.load %arg20[%c0_71, %c0_72] : memref<16x32xbf16, #tpu.memory_space<vmem>>, vector<16x32xbf16>
      tpu.vector_store %arg20[%c0_71, %c0_72], %141 {strides = array<i32>} : memref<16x32xbf16, #tpu.memory_space<vmem>>, vector<16x32xbf16>,
    } else {
    }
    %c0 = arith.constant 0 : index
    %c0_1 = arith.constant 0 : index
    %c0_2 = arith.constant 0 : index
    %3 = vector.load %arg2[%c0, %c0_1, %c0_2] : memref<1x8x32xf32, #tpu.memory_space<vmem>>, vector<1x8x32xf32>
    %4 = vector.shape_cast %3 : vector<1x8x32xf32> to vector<8x32xf32>
    %c0_3 = arith.constant 0 : index
    %c0_4 = arith.constant 0 : index
    %c0_5 = arith.constant 0 : index
    %5 = vector.load %arg3[%c0_3, %c0_4, %c0_5] : memref<1x8x32xf32, #tpu.memory_space<vmem>>, vector<1x8x32xf32>
    %6 = vector.shape_cast %5 : vector<1x8x32xf32> to vector<8x32xf32>
    %7 = arith.addf %4, %6 : vector<8x32xf32>
    %8 = arith.truncf %7 : vector<8x32xf32> to vector<8x32xbf16>
    %c0_6 = arith.constant 0 : index
    %c0_7 = arith.constant 0 : index
    %9 = vector.load %arg6[%c0_6, %c0_7] : memref<32x32xbf16, #tpu.memory_space<vmem>>, vector<32x32xbf16>
    %cst = arith.constant dense<0.000000e+00> : vector<8x32xf32>
    %10 = tpu.matmul %8, %9, %cst {dimension_numbers = #tpu.dot_dimension_numbers<[1], [0], [0], [1], [0, 0, 1, 1], [], []>} : vector<8x32xbf16>, vector<32x32xbf16>, vector<8x32xf32> -> vector<8x32xf32>
    %c0_8 = arith.constant 0 : index
    %c0_9 = arith.constant 0 : index
    %11 = vector.load %arg7[%c0_8, %c0_9] : memref<1x32xf32, #tpu.memory_space<vmem>>, vector<1x32xf32>
    %12 = vector.broadcast %11 : vector<1x32xf32> to vector<8x32xf32>
    %13 = arith.addf %10, %12 : vector<8x32xf32>
    %cst_10 = arith.constant 0.353553385 : f32
    %14 = vector.broadcast %cst_10 : f32 to vector<8x32xf32>
    %15 = arith.mulf %13, %14 : vector<8x32xf32>
    %16 = arith.truncf %15 : vector<8x32xf32> to vector<8x32xbf16>
    %c0_11 = arith.constant 0 : index
    %c0_12 = arith.constant 0 : index
    %17 = vector.load %arg19[%c0_11, %c0_12] : memref<16x32xbf16, #tpu.memory_space<vmem>>, vector<16x32xbf16>
    %c0_13 = arith.constant 0 : index
    %c0_14 = arith.constant 0 : index
    %18 = vector.load %arg20[%c0_13, %c0_14] : memref<16x32xbf16, #tpu.memory_space<vmem>>, vector<16x32xbf16>
    %19 = vector.extract_strided_slice %16 {offsets = [0, 0], sizes = [8, 8], strides = [1, 1]} : vector<8x32xbf16> to vector<8x8xbf16>
    %20 = vector.extract_strided_slice %17 {offsets = [0, 0], sizes = [16, 8], strides = [1, 1]} : vector<16x32xbf16> to vector<16x8xbf16>
    %21 = vector.extract_strided_slice %18 {offsets = [0, 0], sizes = [16, 8], strides = [1, 1]} : vector<16x32xbf16> to vector<16x8xbf16>
    %cst_15 = arith.constant dense<0.000000e+00> : vector<8x16xf32>
    %22 = tpu.matmul %19, %20, %cst_15 {dimension_numbers = #tpu.dot_dimension_numbers<[1], [1], [0], [0], [0, 0, 1, 0], [], []>} : vector<8x8xbf16>, vector<16x8xbf16>, vector<8x16xf32> -> vector<8x16xf32>
    %cst_16 = arith.constant dense<0xFF800000> : vector<8xf32>
    %23 = vector.multi_reduction <maximumf>, %22, %cst_16 [1] : vector<8x16xf32> to vector<8xf32>
    %24 = vector.shape_cast %23 : vector<8xf32> to vector<8x1xf32>
    %25 = vector.broadcast %24 : vector<8x1xf32> to vector<8x16xf32>
    %26 = arith.subf %22, %25 : vector<8x16xf32>
    %27 = math.exp %26 : vector<8x16xf32>
    %cst_17 = arith.constant dense<0.000000e+00> : vector<8xf32>
    %28 = vector.multi_reduction <add>, %27, %cst_17 [1] : vector<8x16xf32> to vector<8xf32>
    %29 = vector.shape_cast %28 : vector<8xf32> to vector<8x1xf32>
    %30 = arith.truncf %27 : vector<8x16xf32> to vector<8x16xbf16>
    %cst_18 = arith.constant dense<0.000000e+00> : vector<8x8xf32>
    %31 = tpu.matmul %30, %21, %cst_18 {dimension_numbers = #tpu.dot_dimension_numbers<[1], [0], [0], [1], [0, 0, 1, 1], [], []>} : vector<8x16xbf16>, vector<16x8xbf16>, vector<8x8xf32> -> vector<8x8xf32>
    %32 = tpu.reciprocal %29 {approx = true} : vector<8x1xf32> -> vector<8x1xf32>
    %33 = vector.broadcast %32 : vector<8x1xf32> to vector<8x8xf32>
    %34 = arith.mulf %31, %33 : vector<8x8xf32>
    %35 = vector.extract_strided_slice %16 {offsets = [0, 8], sizes = [8, 8], strides = [1, 1]} : vector<8x32xbf16> to vector<8x8xbf16>
    %36 = vector.extract_strided_slice %17 {offsets = [0, 8], sizes = [16, 8], strides = [1, 1]} : vector<16x32xbf16> to vector<16x8xbf16>
    %37 = vector.extract_strided_slice %18 {offsets = [0, 8], sizes = [16, 8], strides = [1, 1]} : vector<16x32xbf16> to vector<16x8xbf16>
    %cst_19 = arith.constant dense<0.000000e+00> : vector<8x16xf32>
    %38 = tpu.matmul %35, %36, %cst_19 {dimension_numbers = #tpu.dot_dimension_numbers<[1], [1], [0], [0], [0, 0, 1, 0], [], []>} : vector<8x8xbf16>, vector<16x8xbf16>, vector<8x16xf32> -> vector<8x16xf32>
    %cst_20 = arith.constant dense<0xFF800000> : vector<8xf32>
    %39 = vector.multi_reduction <maximumf>, %38, %cst_20 [1] : vector<8x16xf32> to vector<8xf32>
    %40 = vector.shape_cast %39 : vector<8xf32> to vector<8x1xf32>
    %41 = vector.broadcast %40 : vector<8x1xf32> to vector<8x16xf32>
    %42 = arith.subf %38, %41 : vector<8x16xf32>
    %43 = math.exp %42 : vector<8x16xf32>
    %cst_21 = arith.constant dense<0.000000e+00> : vector<8xf32>
    %44 = vector.multi_reduction <add>, %43, %cst_21 [1] : vector<8x16xf32> to vector<8xf32>
    %45 = vector.shape_cast %44 : vector<8xf32> to vector<8x1xf32>
    %46 = arith.truncf %43 : vector<8x16xf32> to vector<8x16xbf16>
    %cst_22 = arith.constant dense<0.000000e+00> : vector<8x8xf32>
    %47 = tpu.matmul %46, %37, %cst_22 {dimension_numbers = #tpu.dot_dimension_numbers<[1], [0], [0], [1], [0, 0, 1, 1], [], []>} : vector<8x16xbf16>, vector<16x8xbf16>, vector<8x8xf32> -> vector<8x8xf32>
    %48 = tpu.reciprocal %45 {approx = true} : vector<8x1xf32> -> vector<8x1xf32>
    %49 = vector.broadcast %48 : vector<8x1xf32> to vector<8x8xf32>
    %50 = arith.mulf %47, %49 : vector<8x8xf32>
    %51 = vector.extract_strided_slice %16 {offsets = [0, 16], sizes = [8, 8], strides = [1, 1]} : vector<8x32xbf16> to vector<8x8xbf16>
    %52 = vector.extract_strided_slice %17 {offsets = [0, 16], sizes = [16, 8], strides = [1, 1]} : vector<16x32xbf16> to vector<16x8xbf16>
    %53 = vector.extract_strided_slice %18 {offsets = [0, 16], sizes = [16, 8], strides = [1, 1]} : vector<16x32xbf16> to vector<16x8xbf16>
    %cst_23 = arith.constant dense<0.000000e+00> : vector<8x16xf32>
    %54 = tpu.matmul %51, %52, %cst_23 {dimension_numbers = #tpu.dot_dimension_numbers<[1], [1], [0], [0], [0, 0, 1, 0], [], []>} : vector<8x8xbf16>, vector<16x8xbf16>, vector<8x16xf32> -> vector<8x16xf32>
    %cst_24 = arith.constant dense<0xFF800000> : vector<8xf32>
    %55 = vector.multi_reduction <maximumf>, %54, %cst_24 [1] : vector<8x16xf32> to vector<8xf32>
    %56 = vector.shape_cast %55 : vector<8xf32> to vector<8x1xf32>
    %57 = vector.broadcast %56 : vector<8x1xf32> to vector<8x16xf32>
    %58 = arith.subf %54, %57 : vector<8x16xf32>
    %59 = math.exp %58 : vector<8x16xf32>
    %cst_25 = arith.constant dense<0.000000e+00> : vector<8xf32>
    %60 = vector.multi_reduction <add>, %59, %cst_25 [1] : vector<8x16xf32> to vector<8xf32>
    %61 = vector.shape_cast %60 : vector<8xf32> to vector<8x1xf32>
    %62 = arith.truncf %59 : vector<8x16xf32> to vector<8x16xbf16>
    %cst_26 = arith.constant dense<0.000000e+00> : vector<8x8xf32>
    %63 = tpu.matmul %62, %53, %cst_26 {dimension_numbers = #tpu.dot_dimension_numbers<[1], [0], [0], [1], [0, 0, 1, 1], [], []>} : vector<8x16xbf16>, vector<16x8xbf16>, vector<8x8xf32> -> vector<8x8xf32>
    %64 = tpu.reciprocal %61 {approx = true} : vector<8x1xf32> -> vector<8x1xf32>
    %65 = vector.broadcast %64 : vector<8x1xf32> to vector<8x8xf32>
    %66 = arith.mulf %63, %65 : vector<8x8xf32>
    %67 = vector.extract_strided_slice %16 {offsets = [0, 24], sizes = [8, 8], strides = [1, 1]} : vector<8x32xbf16> to vector<8x8xbf16>
    %68 = vector.extract_strided_slice %17 {offsets = [0, 24], sizes = [16, 8], strides = [1, 1]} : vector<16x32xbf16> to vector<16x8xbf16>
    %69 = vector.extract_strided_slice %18 {offsets = [0, 24], sizes = [16, 8], strides = [1, 1]} : vector<16x32xbf16> to vector<16x8xbf16>
    %cst_27 = arith.constant dense<0.000000e+00> : vector<8x16xf32>
    %70 = tpu.matmul %67, %68, %cst_27 {dimension_numbers = #tpu.dot_dimension_numbers<[1], [1], [0], [0], [0, 0, 1, 0], [], []>} : vector<8x8xbf16>, vector<16x8xbf16>, vector<8x16xf32> -> vector<8x16xf32>
    %cst_28 = arith.constant dense<0xFF800000> : vector<8xf32>
    %71 = vector.multi_reduction <maximumf>, %70, %cst_28 [1] : vector<8x16xf32> to vector<8xf32>
    %72 = vector.shape_cast %71 : vector<8xf32> to vector<8x1xf32>
    %73 = vector.broadcast %72 : vector<8x1xf32> to vector<8x16xf32>
    %74 = arith.subf %70, %73 : vector<8x16xf32>
    %75 = math.exp %74 : vector<8x16xf32>
    %cst_29 = arith.constant dense<0.000000e+00> : vector<8xf32>
    %76 = vector.multi_reduction <add>, %75, %cst_29 [1] : vector<8x16xf32> to vector<8xf32>
    %77 = vector.shape_cast %76 : vector<8xf32> to vector<8x1xf32>
    %78 = arith.truncf %75 : vector<8x16xf32> to vector<8x16xbf16>
    %cst_30 = arith.constant dense<0.000000e+00> : vector<8x8xf32>
    %79 = tpu.matmul %78, %69, %cst_30 {dimension_numbers = #tpu.dot_dimension_numbers<[1], [0], [0], [1], [0, 0, 1, 1], [], []>} : vector<8x16xbf16>, vector<16x8xbf16>, vector<8x8xf32> -> vector<8x8xf32>
    %80 = tpu.reciprocal %77 {approx = true} : vector<8x1xf32> -> vector<8x1xf32>
    %81 = vector.broadcast %80 : vector<8x1xf32> to vector<8x8xf32>
    %82 = arith.mulf %79, %81 : vector<8x8xf32>
    %83 = tpu.concatenate %34, %50, %66, %82 in 1 : vector<8x8xf32>, vector<8x8xf32>, vector<8x8xf32>, vector<8x8xf32> -> vector<8x32xf32>
    %84 = arith.truncf %83 : vector<8x32xf32> to vector<8x32xbf16>
    %c0_31 = arith.constant 0 : index
    %c0_32 = arith.constant 0 : index
    %85 = vector.load %arg12[%c0_31, %c0_32] : memref<32x32xbf16, #tpu.memory_space<vmem>>, vector<32x32xbf16>
    %cst_33 = arith.constant dense<0.000000e+00> : vector<8x32xf32>
    %86 = tpu.matmul %84, %85, %cst_33 {dimension_numbers = #tpu.dot_dimension_numbers<[1], [0], [0], [1], [0, 0, 1, 1], [], []>} : vector<8x32xbf16>, vector<32x32xbf16>, vector<8x32xf32> -> vector<8x32xf32>
    %c0_34 = arith.constant 0 : index
    %c0_35 = arith.constant 0 : index
    %87 = vector.load %arg13[%c0_34, %c0_35] : memref<1x32xf32, #tpu.memory_space<vmem>>, vector<1x32xf32>
    %88 = vector.broadcast %87 : vector<1x32xf32> to vector<8x32xf32>
    %89 = arith.addf %86, %88 : vector<8x32xf32>
    %90 = arith.truncf %89 : vector<8x32xf32> to vector<8x32xbf16>
    %c0_36 = arith.constant 0 : index
    %c0_37 = arith.constant 0 : index
    %91 = vector.load %arg14[%c0_36, %c0_37] : memref<32x32xbf16, #tpu.memory_space<vmem>>, vector<32x32xbf16>
    %cst_38 = arith.constant dense<0.000000e+00> : vector<8x32xf32>
    %92 = tpu.matmul %90, %91, %cst_38 {dimension_numbers = #tpu.dot_dimension_numbers<[1], [0], [0], [1], [0, 0, 1, 1], [], []>} : vector<8x32xbf16>, vector<32x32xbf16>, vector<8x32xf32> -> vector<8x32xf32>
    %c0_39 = arith.constant 0 : index
    %c0_40 = arith.constant 0 : index
    %93 = vector.load %arg15[%c0_39, %c0_40] : memref<1x32xf32, #tpu.memory_space<vmem>>, vector<1x32xf32>
    %94 = vector.broadcast %93 : vector<1x32xf32> to vector<8x32xf32>
    %95 = arith.addf %92, %94 : vector<8x32xf32>
    %96 = arith.addf %4, %95 : vector<8x32xf32>
    %cst_41 = arith.constant dense<0.000000e+00> : vector<8xf32>
    %97 = vector.multi_reduction <add>, %96, %cst_41 [1] : vector<8x32xf32> to vector<8xf32>
    %98 = vector.shape_cast %97 : vector<8xf32> to vector<8x1xf32>
    %cst_42 = arith.constant 3.200000e+01 : f32
    %99 = vector.broadcast %cst_42 : f32 to vector<8x1xf32>
    %100 = arith.divf %98, %99 : vector<8x1xf32>
    %101 = vector.broadcast %100 : vector<8x1xf32> to vector<8x32xf32>
    %102 = arith.subf %96, %101 : vector<8x32xf32>
    %103 = arith.mulf %102, %102 : vector<8x32xf32>
    %cst_43 = arith.constant dense<0.000000e+00> : vector<8xf32>
    %104 = vector.multi_reduction <add>, %103, %cst_43 [1] : vector<8x32xf32> to vector<8xf32>
    %105 = vector.shape_cast %104 : vector<8xf32> to vector<8x1xf32>
    %cst_44 = arith.constant 3.200000e+01 : f32
    %106 = vector.broadcast %cst_44 : f32 to vector<8x1xf32>
    %107 = arith.divf %105, %106 : vector<8x1xf32>
    %cst_45 = arith.constant 9.99999974E-6 : f32
    %108 = vector.broadcast %cst_45 : f32 to vector<8x1xf32>
    %109 = arith.addf %107, %108 : vector<8x1xf32>
    %110 = math.rsqrt %109 : vector<8x1xf32>
    %111 = vector.broadcast %110 : vector<8x1xf32> to vector<8x32xf32>
    %112 = arith.mulf %102, %111 : vector<8x32xf32>
    %c0_46 = arith.constant 0 : index
    %c0_47 = arith.constant 0 : index
    %113 = vector.load %arg16[%c0_46, %c0_47] : memref<1x32xf32, #tpu.memory_space<vmem>>, vector<1x32xf32>
    %114 = vector.broadcast %113 : vector<1x32xf32> to vector<8x32xf32>
    %115 = arith.mulf %112, %114 : vector<8x32xf32>
    %c0_48 = arith.constant 0 : index
    %c0_49 = arith.constant 0 : index
    %116 = vector.load %arg17[%c0_48, %c0_49] : memref<1x32xf32, #tpu.memory_space<vmem>>, vector<1x32xf32>
    %117 = vector.broadcast %116 : vector<1x32xf32> to vector<8x32xf32>
    %118 = arith.addf %115, %117 : vector<8x32xf32>
    %c0_50 = arith.constant 0 : index
    %c0_51 = arith.constant 0 : index
    %c0_52 = arith.constant 0 : index
    %119 = vector.load %arg18[%c0_50, %c0_51, %c0_52] : memref<1x8x32xf32, #tpu.memory_space<vmem>>, vector<1x8x32xf32>
    %120 = vector.shape_cast %119 : vector<1x8x32xf32> to vector<8x32xf32>
    %121 = vector.shape_cast %118 : vector<8x32xf32> to vector<1x8x32xf32>
    tpu.vector_store %arg18[%c0_50, %c0_51, %c0_52], %121 {strides = array<i32>} : memref<1x8x32xf32, #tpu.memory_space<vmem>>, vector<1x8x32xf32>,
    return
  }
  func.func @transform_0(%arg0: i32, %arg1: i32) -> (i32, i32, i32) {
    %c0_i32 = arith.constant 0 : i32
    %c0_i32_0 = arith.constant 0 : i32
    return %arg0, %arg1, %c0_i32 : i32, i32, i32
  }
  func.func @transform_1(%arg0: i32, %arg1: i32) -> (i32, i32, i32) {
    %c0_i32 = arith.constant 0 : i32
    %c0_i32_0 = arith.constant 0 : i32
    return %arg0, %arg1, %c0_i32 : i32, i32, i32
  }
  func.func @transform_2(%arg0: i32, %arg1: i32) -> (i32, i32, i32) {
    %c0_i32 = arith.constant 0 : i32
    %c0_i32_0 = arith.constant 0 : i32
    %c0_i32_1 = arith.constant 0 : i32
    return %arg0, %c0_i32, %c0_i32_0 : i32, i32, i32
  }
  func.func @transform_3(%arg0: i32, %arg1: i32) -> (i32, i32, i32) {
    %c0_i32 = arith.constant 0 : i32
    %c0_i32_0 = arith.constant 0 : i32
    %c0_i32_1 = arith.constant 0 : i32
    return %arg0, %c0_i32, %c0_i32_0 : i32, i32, i32
  }
  func.func @transform_4(%arg0: i32, %arg1: i32) -> (i32, i32) {
    %c0_i32 = arith.constant 0 : i32
    %c0_i32_0 = arith.constant 0 : i32
    %c0_i32_1 = arith.constant 0 : i32
    return %c0_i32, %c0_i32_0 : i32, i32
  }
  func.func @transform_5(%arg0: i32, %arg1: i32) -> (i32, i32) {
    %c0_i32 = arith.constant 0 : i32
    %c0_i32_0 = arith.constant 0 : i32
    %c0_i32_1 = arith.constant 0 : i32
    return %c0_i32, %c0_i32_0 : i32, i32
  }
  func.func @transform_6(%arg0: i32, %arg1: i32) -> (i32, i32) {
    %c0_i32 = arith.constant 0 : i32
    %c0_i32_0 = arith.constant 0 : i32
    %c0_i32_1 = arith.constant 0 : i32
    return %c0_i32, %c0_i32_0 : i32, i32
  }
  func.func @transform_7(%arg0: i32, %arg1: i32) -> (i32, i32) {
    %c0_i32 = arith.constant 0 : i32
    %c0_i32_0 = arith.constant 0 : i32
    %c0_i32_1 = arith.constant 0 : i32
    return %c0_i32, %c0_i32_0 : i32, i32
  }
  func.func @transform_8(%arg0: i32, %arg1: i32) -> (i32, i32) {
    %c0_i32 = arith.constant 0 : i32
    %c0_i32_0 = arith.constant 0 : i32
    %c0_i32_1 = arith.constant 0 : i32
    return %c0_i32, %c0_i32_0 : i32, i32
  }
  func.func @transform_9(%arg0: i32, %arg1: i32) -> (i32, i32) {
    %c0_i32 = arith.constant 0 : i32
    %c0_i32_0 = arith.constant 0 : i32
    %c0_i32_1 = arith.constant 0 : i32
    return %c0_i32, %c0_i32_0 : i32, i32
  }
  func.func @transform_10(%arg0: i32, %arg1: i32) -> (i32, i32) {
    %c0_i32 = arith.constant 0 : i32
    %c0_i32_0 = arith.constant 0 : i32
    %c0_i32_1 = arith.constant 0 : i32
    return %c0_i32, %c0_i32_0 : i32, i32
  }
  func.func @transform_11(%arg0: i32, %arg1: i32) -> (i32, i32) {
    %c0_i32 = arith.constant 0 : i32
    %c0_i32_0 = arith.constant 0 : i32
    %c0_i32_1 = arith.constant 0 : i32
    return %c0_i32, %c0_i32_0 : i32, i32
  }
  func.func @transform_12(%arg0: i32, %arg1: i32) -> (i32, i32) {
    %c0_i32 = arith.constant 0 : i32
    %c0_i32_0 = arith.constant 0 : i32
    %c0_i32_1 = arith.constant 0 : i32
    return %c0_i32, %c0_i32_0 : i32, i32
  }
  func.func @transform_13(%arg0: i32, %arg1: i32) -> (i32, i32) {
    %c0_i32 = arith.constant 0 : i32
    %c0_i32_0 = arith.constant 0 : i32
    %c0_i32_1 = arith.constant 0 : i32
    return %c0_i32, %c0_i32_0 : i32, i32
  }
  func.func @transform_14(%arg0: i32, %arg1: i32) -> (i32, i32) {
    %c0_i32 = arith.constant 0 : i32
    %c0_i32_0 = arith.constant 0 : i32
    %c0_i32_1 = arith.constant 0 : i32
    return %c0_i32, %c0_i32_0 : i32, i32
  }
  func.func @transform_15(%arg0: i32, %arg1: i32) -> (i32, i32) {
    %c0_i32 = arith.constant 0 : i32
    %c0_i32_0 = arith.constant 0 : i32
    %c0_i32_1 = arith.constant 0 : i32
    return %c0_i32, %c0_i32_0 : i32, i32
  }
  func.func @transform_16(%arg0: i32, %arg1: i32) -> (i32, i32, i32) {
    %c0_i32 = arith.constant 0 : i32
    %c0_i32_0 = arith.constant 0 : i32
    return %arg0, %arg1, %c0_i32 : i32, i32, i32
  }
}

</mosaic_0001>

<llo_original>
// kernel: tpu_custom_call.1
$region0: #{tpu_custom_call.1}
  #allocation0 [shape = 'u32[]', space=smem, size = 0x4, offset = 0x4, fixed_abs, tag = 'smem constant byte address 0x4 - core index']
  #allocation1 [shape = 'u32[72,128]{1,0:T(1,128)}', space=vmem, size = 0x9000, scoped, tag = 'internal scratch']
  #allocation2 [shape = 'bf16[16,32]{1,0:T(8,128)(2,1)}', space=vmem, size = 0x1000, scoped, tag = 'scratch operand']
  #allocation3 [shape = 'bf16[16,32]{1,0:T(8,128)(2,1)}', space=vmem, size = 0x1000, scoped, tag = 'scratch operand']
  %s0 = inlined_call_operand.hbm [shape: f32[2,8,32], index: 0, kind: input, shape index: {}]
  %s1 = inlined_call_operand.hbm [shape: f32[2,8,32], index: 1, kind: input, shape index: {}]
  %s2 = inlined_call_operand.hbm [shape: f32[2,16,32], index: 2, kind: input, shape index: {}]
  %s3 = inlined_call_operand.hbm [shape: f32[2,16,32], index: 3, kind: input, shape index: {}]
  %s4 = inlined_call_operand.hbm [shape: bf16[32,32], index: 4, kind: input, shape index: {}]
  %s5 = inlined_call_operand.vmem [shape: f32[1,32], index: 5, kind: input, shape index: {}]
  %s6 = inlined_call_operand.hbm [shape: bf16[32,32], index: 6, kind: input, shape index: {}]
  %s7 = inlined_call_operand.vmem [shape: f32[1,32], index: 7, kind: input, shape index: {}]
  %s8 = inlined_call_operand.hbm [shape: bf16[32,32], index: 8, kind: input, shape index: {}]
  %s9 = inlined_call_operand.vmem [shape: f32[1,32], index: 9, kind: input, shape index: {}]
  %s10 = inlined_call_operand.hbm [shape: bf16[32,32], index: 10, kind: input, shape index: {}]
  %s11 = inlined_call_operand.vmem [shape: f32[1,32], index: 11, kind: input, shape index: {}]
  %s12 = inlined_call_operand.hbm [shape: bf16[32,32], index: 12, kind: input, shape index: {}]
  %s13 = inlined_call_operand.vmem [shape: f32[1,32], index: 13, kind: input, shape index: {}]
  %s14 = inlined_call_operand.vmem [shape: f32[1,32], index: 14, kind: input, shape index: {}]
  %s15 = inlined_call_operand.vmem [shape: f32[1,32], index: 15, kind: input, shape index: {}]
  %s16 = inlined_call_operand.hbm [shape: f32[2,8,32], index: 16, kind: output, shape index: {}]
  %s17 = sld [smem:[#allocation0]]
  $region137: #{tpu_custom_call.1} parent=0
    _
  %s19 = ssub.s32 1, %s17
  %s20 = scalar_select 0, %s19, %s17
  $region1: #{tpu_custom_call.1} parent=0
    #allocation4 [shape = 'u8[8192]{0}', space=vmem, size = 0x2000, scoped, tag = 'input window, operand 0']
    #allocation5 [shape = 's32[2]{0}', space=sflag, size = 0x8, scoped, tag = 'scoped memory for tpu_custom_call.1']
    #allocation6 [shape = 's32[2]{0}', space=sflag, size = 0x8, scoped, tag = 'scoped memory for tpu_custom_call.1']
    #allocation7 [shape = 'u8[8192]{0}', space=vmem, size = 0x2000, scoped, tag = 'input window, operand 1']
    #allocation8 [shape = 's32[2]{0}', space=sflag, size = 0x8, scoped, tag = 'scoped memory for tpu_custom_call.1']
    #allocation9 [shape = 'u8[16384]{0}', space=vmem, size = 0x4000, scoped, tag = 'input window, operand 2']
    #allocation10 [shape = 'u8[16384]{0}', space=vmem, size = 0x4000, scoped, tag = 'input window, operand 3']
    #allocation11 [shape = 's32[2]{0}', space=sflag, size = 0x8, scoped, tag = 'scoped memory for tpu_custom_call.1']
    #allocation12 [shape = 'u8[8192]{0}', space=vmem, size = 0x2000, scoped, tag = 'input window, operand 4, single buffered']
    #allocation13 [shape = 'u8[8192]{0}', space=vmem, size = 0x2000, scoped, tag = 'input window, operand 6, single buffered']
    #allocation14 [shape = 's32[1]{0}', space=sflag, size = 0x4, scoped, tag = 'scoped memory for tpu_custom_call.1']
    #allocation15 [shape = 'u8[8192]{0}', space=vmem, size = 0x2000, scoped, tag = 'input window, operand 8, single buffered']
    #allocation16 [shape = 'u8[8192]{0}', space=vmem, size = 0x2000, scoped, tag = 'input window, operand 10, single buffered']
    #allocation17 [shape = 's32[1]{0}', space=sflag, size = 0x4, scoped, tag = 'scoped memory for tpu_custom_call.1']
    #allocation18 [shape = 'u8[8192]{0}', space=vmem, size = 0x2000, scoped, tag = 'input window, operand 12, single buffered']
    #allocation19 [shape = 'u8[8192]{0}', space=vmem, size = 0x2000, scoped, tag = 'output window, operand 0']
    %21 = vsyncpa [#allocation5], 0
    %s22 = scalar_lea.sflag [#allocation5], 1
    %23 = vsyncpa %s22, 0
    %24 = vsyncpa [#allocation8], 0
    %s25 = scalar_lea.sflag [#allocation8], 1
    %26 = vsyncpa %s25, 0
    %27 = vsyncpa [#allocation11], 0
    %s28 = scalar_lea.sflag [#allocation11], 1
    %29 = vsyncpa %s28, 0
    %30 = vsyncpa [#allocation14], 0
    %31 = vsyncpa [#allocation17], 0
    %32 = vsyncpa [#allocation6], 0
    %s33 = scalar_lea.sflag [#allocation6], 1
    %34 = vsyncpa %s33, 0
    loop: start=0, step=1, limit=4
    $region2: #{tpu_custom_call.1} parent=1 // loop_pre_header
      _
    $region3: #{tpu_custom_call.1} parent=1 // loop_header
      %s36 = sphi 0, %s40
      %p37 = scmp.ge.s32.totalorder %s36, 4
      %s43 = sphi 0, %s55
      %s44 = sphi 0, %s51
      %s45 = sphi 0, %s43
      %s46 = sphi 0, %s44
      %s47 = sphi 0, %s45
      %s48 = sphi 0, %s46
      %s60 = sphi 0, %s62
      %s63 = sphi 0, %s60
      %s64 = sphi 0, %s63
      %s80 = sphi 0, %s64
      %s88 = sphi 0, %s90
      %s91 = sphi 0, %s88
      %s92 = sphi 0, %s91
      %s108 = sphi 0, %s92
      %s114 = sphi 0, %s116
      %s117 = sphi 0, %s114
      %s118 = sphi 0, %s117
      %s134 = sphi 0, %s118
      %s140 = sphi 0, %s142
      %s143 = sphi 0, %s140
      %s144 = sphi 0, %s143
      %s160 = sphi 0, %s144
      %s164 = sphi 0, %s164
      %s166 = sphi 0, %s164
      %s167 = sphi 0, %s166
      %s181 = sphi 0, %s167
      %s185 = sphi 0, %s185
      %s187 = sphi 0, %s185
      %s188 = sphi 0, %s187
      %s202 = sphi 0, %s188
      %s206 = sphi 0, %s206
      %s208 = sphi 0, %s206
      %s209 = sphi 0, %s208
      %s223 = sphi 0, %s209
      %s227 = sphi 0, %s227
      %s229 = sphi 0, %s227
      %s230 = sphi 0, %s229
      %s244 = sphi 0, %s230
      %s248 = sphi 0, %s248
      %s250 = sphi 0, %s248
      %s251 = sphi 0, %s250
      %s265 = sphi 0, %s251
      %s269 = sphi 0, %s269
      %s271 = sphi 0, %s269
      %s272 = sphi 0, %s271
      %s286 = sphi 0, %s272
      %s290 = sphi 0, %s290
      %s292 = sphi 0, %s290
      %s293 = sphi 0, %s292
      %s307 = sphi 0, %s293
      %s311 = sphi 0, %s311
      %s313 = sphi 0, %s311
      %s314 = sphi 0, %s313
      %s328 = sphi 0, %s314
      %s332 = sphi 0, %s332
      %s334 = sphi 0, %s332
      %s335 = sphi 0, %s334
      %s349 = sphi 0, %s335
      %s353 = sphi 0, %s353
      %s355 = sphi 0, %s353
      %s356 = sphi 0, %s355
      %s370 = sphi 0, %s356
      %s374 = sphi 0, %s374
      %s376 = sphi 0, %s374
      %s377 = sphi 0, %s376
      %s391 = sphi 0, %s377
      %s395 = sphi 0, %s395
      %s397 = sphi 0, %s395
      %s398 = sphi 0, %s397
      %s412 = sphi 0, %s398
      %s420 = sphi 0, %s422
      %s423 = sphi 0, %s420
      %s424 = sphi 0, %s423
      %s440 = sphi 0, %s424
    $region4: #{tpu_custom_call.1} parent=1 // loop_header_branch
      %39 = sbr.rel (%p37) target = $region8
    $region5: #{tpu_custom_call.1} parent=1 // loop_body
      %s41 = ssub.s32 %s36, 1
      %s42 = ssub.s32 %s36, 2
      %s49 = sadd.s32 1, %s44
      %p50 = scmp.ge.s32.totalorder %s49, 1
      %s51 = scalar_select %p50, 0, %s49
      %s52 = sadd.s32 1, %s43
      %s53 = scalar_select %p50, %s52, %s43
      %p54 = scmp.ge.s32.totalorder %s53, 2
      %s55 = scalar_select %p54, 0, %s53
      %s56 = ssub.s32 %s43, %s55
      %s57 = ssub.s32 %s44, %s51
      %s58 = sor.u32 %s56, %s57
      %p59 = scmp.eq.s32.totalorder %s58, 0
      %s61 = sadd.s32 %s60, 1
      %s62 = scalar_select %p59, %s60, %s61
      %p65 = pneg %p59
      %p66 = scmp.eq.s32.totalorder %s36, 1
      %p67 = por %p65, %p66
      %p68 = scmp.ne.s32.totalorder %s60, %s63
      %p69 = scmp.eq.s32.totalorder %s36, 0
      %p70 = por %p68, %p69
      %p71 = scmp.ne.s32.totalorder %s60, %s63
      %p72 = scmp.eq.s32.totalorder %s41, 1
      %p73 = por %p71, %p72
      %p74 = scmp.ne.s32.totalorder %s63, %s64
      %p75 = scmp.eq.s32.totalorder %s41, 0
      %p76 = por %p74, %p75
      %p77 = scmp.ne.s32.totalorder %s63, %s64
      %p78 = scmp.eq.s32.totalorder %s42, 1
      %p79 = por %p77, %p78
      %p81 = scmp.ne.s32.totalorder %s64, %s80
      %p82 = scmp.eq.s32.totalorder %s42, 0
      %p83 = por %p81, %p82
      %s84 = ssub.s32 %s43, %s55
      %s85 = ssub.s32 %s44, %s51
      %s86 = sor.u32 %s84, %s85
      %p87 = scmp.eq.s32.totalorder %s86, 0
      %s89 = sadd.s32 %s88, 1
      %s90 = scalar_select %p87, %s88, %s89
      %p93 = pneg %p87
      %p94 = scmp.eq.s32.totalorder %s36, 1
      %p95 = por %p93, %p94
      %p96 = scmp.ne.s32.totalorder %s88, %s91
      %p97 = scmp.eq.s32.totalorder %s36, 0
      %p98 = por %p96, %p97
      %p99 = scmp.ne.s32.totalorder %s88, %s91
      %p100 = scmp.eq.s32.totalorder %s41, 1
      %p101 = por %p99, %p100
      %p102 = scmp.ne.s32.totalorder %s91, %s92
      %p103 = scmp.eq.s32.totalorder %s41, 0
      %p104 = por %p102, %p103
      %p105 = scmp.ne.s32.totalorder %s91, %s92
      %p106 = scmp.eq.s32.totalorder %s42, 1
      %p107 = por %p105, %p106
      %p109 = scmp.ne.s32.totalorder %s92, %s108
      %p110 = scmp.eq.s32.totalorder %s42, 0
      %p111 = por %p109, %p110
      %s112 = ssub.s32 %s43, %s55
      %p113 = scmp.eq.s32.totalorder %s112, 0
      %s115 = sadd.s32 %s114, 1
      %s116 = scalar_select %p113, %s114, %s115
      %p119 = pneg %p113
      %p120 = scmp.eq.s32.totalorder %s36, 1
      %p121 = por %p119, %p120
      %p122 = scmp.ne.s32.totalorder %s114, %s117
      %p123 = scmp.eq.s32.totalorder %s36, 0
      %p124 = por %p122, %p123
      %p125 = scmp.ne.s32.totalorder %s114, %s117
      %p126 = scmp.eq.s32.totalorder %s41, 1
      %p127 = por %p125, %p126
      %p128 = scmp.ne.s32.totalorder %s117, %s118
      %p129 = scmp.eq.s32.totalorder %s41, 0
      %p130 = por %p128, %p129
      %p131 = scmp.ne.s32.totalorder %s117, %s118
      %p132 = scmp.eq.s32.totalorder %s42, 1
      %p133 = por %p131, %p132
      %p135 = scmp.ne.s32.totalorder %s118, %s134
      %p136 = scmp.eq.s32.totalorder %s42, 0
      %p137 = por %p135, %p136
      %s138 = ssub.s32 %s43, %s55
      %p139 = scmp.eq.s32.totalorder %s138, 0
      %s141 = sadd.s32 %s140, 1
      %s142 = scalar_select %p139, %s140, %s141
      %p145 = pneg %p139
      %p146 = scmp.eq.s32.totalorder %s36, 1
      %p147 = por %p145, %p146
      %p148 = scmp.ne.s32.totalorder %s140, %s143
      %p149 = scmp.eq.s32.totalorder %s36, 0
      %p150 = por %p148, %p149
      %p151 = scmp.ne.s32.totalorder %s140, %s143
      %p152 = scmp.eq.s32.totalorder %s41, 1
      %p153 = por %p151, %p152
      %p154 = scmp.ne.s32.totalorder %s143, %s144
      %p155 = scmp.eq.s32.totalorder %s41, 0
      %p156 = por %p154, %p155
      %p157 = scmp.ne.s32.totalorder %s143, %s144
      %p158 = scmp.eq.s32.totalorder %s42, 1
      %p159 = por %p157, %p158
      %p161 = scmp.ne.s32.totalorder %s144, %s160
      %p162 = scmp.eq.s32.totalorder %s42, 0
      %p163 = por %p161, %p162
      %s165 = sadd.s32 %s164, 1
      %p168 = scmp.eq.s32.totalorder %s36, 1
      %p169 = scmp.ne.s32.totalorder %s164, %s166
      %p170 = scmp.eq.s32.totalorder %s36, 0
      %p171 = por %p169, %p170
      %p172 = scmp.ne.s32.totalorder %s164, %s166
      %p173 = scmp.eq.s32.totalorder %s41, 1
      %p174 = por %p172, %p173
      %p175 = scmp.ne.s32.totalorder %s166, %s167
      %p176 = scmp.eq.s32.totalorder %s41, 0
      %p177 = por %p175, %p176
      %p178 = scmp.ne.s32.totalorder %s166, %s167
      %p179 = scmp.eq.s32.totalorder %s42, 1
      %p180 = por %p178, %p179
      %p182 = scmp.ne.s32.totalorder %s167, %s181
      %p183 = scmp.eq.s32.totalorder %s42, 0
      %p184 = por %p182, %p183
      %s186 = sadd.s32 %s185, 1
      %p189 = scmp.eq.s32.totalorder %s36, 1
      %p190 = scmp.ne.s32.totalorder %s185, %s187
      %p191 = scmp.eq.s32.totalorder %s36, 0
      %p192 = por %p190, %p191
      %p193 = scmp.ne.s32.totalorder %s185, %s187
      %p194 = scmp.eq.s32.totalorder %s41, 1
      %p195 = por %p193, %p194
      %p196 = scmp.ne.s32.totalorder %s187, %s188
      %p197 = scmp.eq.s32.totalorder %s41, 0
      %p198 = por %p196, %p197
      %p199 = scmp.ne.s32.totalorder %s187, %s188
      %p200 = scmp.eq.s32.totalorder %s42, 1
      %p201 = por %p199, %p200
      %p203 = scmp.ne.s32.totalorder %s188, %s202
      %p204 = scmp.eq.s32.totalorder %s42, 0
      %p205 = por %p203, %p204
      %s207 = sadd.s32 %s206, 1
      %p210 = scmp.eq.s32.totalorder %s36, 1
      %p211 = scmp.ne.s32.totalorder %s206, %s208
      %p212 = scmp.eq.s32.totalorder %s36, 0
      %p213 = por %p211, %p212
      %p214 = scmp.ne.s32.totalorder %s206, %s208
      %p215 = scmp.eq.s32.totalorder %s41, 1
      %p216 = por %p214, %p215
      %p217 = scmp.ne.s32.totalorder %s208, %s209
      %p218 = scmp.eq.s32.totalorder %s41, 0
      %p219 = por %p217, %p218
      %p220 = scmp.ne.s32.totalorder %s208, %s209
      %p221 = scmp.eq.s32.totalorder %s42, 1
      %p222 = por %p220, %p221
      %p224 = scmp.ne.s32.totalorder %s209, %s223
      %p225 = scmp.eq.s32.totalorder %s42, 0
      %p226 = por %p224, %p225
      %s228 = sadd.s32 %s227, 1
      %p231 = scmp.eq.s32.totalorder %s36, 1
      %p232 = scmp.ne.s32.totalorder %s227, %s229
      %p233 = scmp.eq.s32.totalorder %s36, 0
      %p234 = por %p232, %p233
      %p235 = scmp.ne.s32.totalorder %s227, %s229
      %p236 = scmp.eq.s32.totalorder %s41, 1
      %p237 = por %p235, %p236
      %p238 = scmp.ne.s32.totalorder %s229, %s230
      %p239 = scmp.eq.s32.totalorder %s41, 0
      %p240 = por %p238, %p239
      %p241 = scmp.ne.s32.totalorder %s229, %s230
      %p242 = scmp.eq.s32.totalorder %s42, 1
      %p243 = por %p241, %p242
      %p245 = scmp.ne.s32.totalorder %s230, %s244
      %p246 = scmp.eq.s32.totalorder %s42, 0
      %p247 = por %p245, %p246
      %s249 = sadd.s32 %s248, 1
      %p252 = scmp.eq.s32.totalorder %s36, 1
      %p253 = scmp.ne.s32.totalorder %s248, %s250
      %p254 = scmp.eq.s32.totalorder %s36, 0
      %p255 = por %p253, %p254
      %p256 = scmp.ne.s32.totalorder %s248, %s250
      %p257 = scmp.eq.s32.totalorder %s41, 1
      %p258 = por %p256, %p257
      %p259 = scmp.ne.s32.totalorder %s250, %s251
      %p260 = scmp.eq.s32.totalorder %s41, 0
      %p261 = por %p259, %p260
      %p262 = scmp.ne.s32.totalorder %s250, %s251
      %p263 = scmp.eq.s32.totalorder %s42, 1
      %p264 = por %p262, %p263
      %p266 = scmp.ne.s32.totalorder %s251, %s265
      %p267 = scmp.eq.s32.totalorder %s42, 0
      %p268 = por %p266, %p267
      %s270 = sadd.s32 %s269, 1
      %p273 = scmp.eq.s32.totalorder %s36, 1
      %p274 = scmp.ne.s32.totalorder %s269, %s271
      %p275 = scmp.eq.s32.totalorder %s36, 0
      %p276 = por %p274, %p275
      %p277 = scmp.ne.s32.totalorder %s269, %s271
      %p278 = scmp.eq.s32.totalorder %s41, 1
      %p279 = por %p277, %p278
      %p280 = scmp.ne.s32.totalorder %s271, %s272
      %p281 = scmp.eq.s32.totalorder %s41, 0
      %p282 = por %p280, %p281
      %p283 = scmp.ne.s32.totalorder %s271, %s272
      %p284 = scmp.eq.s32.totalorder %s42, 1
      %p285 = por %p283, %p284
      %p287 = scmp.ne.s32.totalorder %s272, %s286
      %p288 = scmp.eq.s32.totalorder %s42, 0
      %p289 = por %p287, %p288
      %s291 = sadd.s32 %s290, 1
      %p294 = scmp.eq.s32.totalorder %s36, 1
      %p295 = scmp.ne.s32.totalorder %s290, %s292
      %p296 = scmp.eq.s32.totalorder %s36, 0
      %p297 = por %p295, %p296
      %p298 = scmp.ne.s32.totalorder %s290, %s292
      %p299 = scmp.eq.s32.totalorder %s41, 1
      %p300 = por %p298, %p299
      %p301 = scmp.ne.s32.totalorder %s292, %s293
      %p302 = scmp.eq.s32.totalorder %s41, 0
      %p303 = por %p301, %p302
      %p304 = scmp.ne.s32.totalorder %s292, %s293
      %p305 = scmp.eq.s32.totalorder %s42, 1
      %p306 = por %p304, %p305
      %p308 = scmp.ne.s32.totalorder %s293, %s307
      %p309 = scmp.eq.s32.totalorder %s42, 0
      %p310 = por %p308, %p309
      %s312 = sadd.s32 %s311, 1
      %p315 = scmp.eq.s32.totalorder %s36, 1
      %p316 = scmp.ne.s32.totalorder %s311, %s313
      %p317 = scmp.eq.s32.totalorder %s36, 0
      %p318 = por %p316, %p317
      %p319 = scmp.ne.s32.totalorder %s311, %s313
      %p320 = scmp.eq.s32.totalorder %s41, 1
      %p321 = por %p319, %p320
      %p322 = scmp.ne.s32.totalorder %s313, %s314
      %p323 = scmp.eq.s32.totalorder %s41, 0
      %p324 = por %p322, %p323
      %p325 = scmp.ne.s32.totalorder %s313, %s314
      %p326 = scmp.eq.s32.totalorder %s42, 1
      %p327 = por %p325, %p326
      %p329 = scmp.ne.s32.totalorder %s314, %s328
      %p330 = scmp.eq.s32.totalorder %s42, 0
      %p331 = por %p329, %p330
      %s333 = sadd.s32 %s332, 1
      %p336 = scmp.eq.s32.totalorder %s36, 1
      %p337 = scmp.ne.s32.totalorder %s332, %s334
      %p338 = scmp.eq.s32.totalorder %s36, 0
      %p339 = por %p337, %p338
      %p340 = scmp.ne.s32.totalorder %s332, %s334
      %p341 = scmp.eq.s32.totalorder %s41, 1
      %p342 = por %p340, %p341
      %p343 = scmp.ne.s32.totalorder %s334, %s335
      %p344 = scmp.eq.s32.totalorder %s41, 0
      %p345 = por %p343, %p344
      %p346 = scmp.ne.s32.totalorder %s334, %s335
      %p347 = scmp.eq.s32.totalorder %s42, 1
      %p348 = por %p346, %p347
      %p350 = scmp.ne.s32.totalorder %s335, %s349
      %p351 = scmp.eq.s32.totalorder %s42, 0
      %p352 = por %p350, %p351
      %s354 = sadd.s32 %s353, 1
      %p357 = scmp.eq.s32.totalorder %s36, 1
      %p358 = scmp.ne.s32.totalorder %s353, %s355
      %p359 = scmp.eq.s32.totalorder %s36, 0
      %p360 = por %p358, %p359
      %p361 = scmp.ne.s32.totalorder %s353, %s355
      %p362 = scmp.eq.s32.totalorder %s41, 1
      %p363 = por %p361, %p362
      %p364 = scmp.ne.s32.totalorder %s355, %s356
      %p365 = scmp.eq.s32.totalorder %s41, 0
      %p366 = por %p364, %p365
      %p367 = scmp.ne.s32.totalorder %s355, %s356
      %p368 = scmp.eq.s32.totalorder %s42, 1
      %p369 = por %p367, %p368
      %p371 = scmp.ne.s32.totalorder %s356, %s370
      %p372 = scmp.eq.s32.totalorder %s42, 0
      %p373 = por %p371, %p372
      %s375 = sadd.s32 %s374, 1
      %p378 = scmp.eq.s32.totalorder %s36, 1
      %p379 = scmp.ne.s32.totalorder %s374, %s376
      %p380 = scmp.eq.s32.totalorder %s36, 0
      %p381 = por %p379, %p380
      %p382 = scmp.ne.s32.totalorder %s374, %s376
      %p383 = scmp.eq.s32.totalorder %s41, 1
      %p384 = por %p382, %p383
      %p385 = scmp.ne.s32.totalorder %s376, %s377
      %p386 = scmp.eq.s32.totalorder %s41, 0
      %p387 = por %p385, %p386
      %p388 = scmp.ne.s32.totalorder %s376, %s377
      %p389 = scmp.eq.s32.totalorder %s42, 1
      %p390 = por %p388, %p389
      %p392 = scmp.ne.s32.totalorder %s377, %s391
      %p393 = scmp.eq.s32.totalorder %s42, 0
      %p394 = por %p392, %p393
      %s396 = sadd.s32 %s395, 1
      %p399 = scmp.eq.s32.totalorder %s36, 1
      %p400 = scmp.ne.s32.totalorder %s395, %s397
      %p401 = scmp.eq.s32.totalorder %s36, 0
      %p402 = por %p400, %p401
      %p403 = scmp.ne.s32.totalorder %s395, %s397
      %p404 = scmp.eq.s32.totalorder %s41, 1
      %p405 = por %p403, %p404
      %p406 = scmp.ne.s32.totalorder %s397, %s398
      %p407 = scmp.eq.s32.totalorder %s41, 0
      %p408 = por %p406, %p407
      %p409 = scmp.ne.s32.totalorder %s397, %s398
      %p410 = scmp.eq.s32.totalorder %s42, 1
      %p411 = por %p409, %p410
      %p413 = scmp.ne.s32.totalorder %s398, %s412
      %p414 = scmp.eq.s32.totalorder %s42, 0
      %p415 = por %p413, %p414
      %s416 = ssub.s32 %s43, %s55
      %s417 = ssub.s32 %s44, %s51
      %s418 = sor.u32 %s416, %s417
      %p419 = scmp.eq.s32.totalorder %s418, 0
      %s421 = sadd.s32 %s420, 1
      %s422 = scalar_select %p419, %s420, %s421
      %p425 = pneg %p419
      %p426 = scmp.eq.s32.totalorder %s36, 1
      %p427 = por %p425, %p426
      %p428 = scmp.ne.s32.totalorder %s420, %s423
      %p429 = scmp.eq.s32.totalorder %s36, 0
      %p430 = por %p428, %p429
      %p431 = scmp.ne.s32.totalorder %s420, %s423
      %p432 = scmp.eq.s32.totalorder %s41, 1
      %p433 = por %p431, %p432
      %p434 = scmp.ne.s32.totalorder %s423, %s424
      %p435 = scmp.eq.s32.totalorder %s41, 0
      %p436 = por %p434, %p435
      %p437 = scmp.ne.s32.totalorder %s423, %s424
      %p438 = scmp.eq.s32.totalorder %s42, 1
      %p439 = por %p437, %p438
      %p441 = scmp.ne.s32.totalorder %s424, %s440
      %p442 = scmp.eq.s32.totalorder %s42, 0
      %p443 = por %p441, %p442
      %p444 = scmp.le.s32.totalorder 1, %s36
      %p445 = scmp.lt.s32.totalorder %s36, 3
      %p446 = pnand %p444, %p445
      %p447 = pneg %p446
      // Predicated region
      $region9: #{tpu_custom_call.1} parent=5 // pred_check
        _
      $region10: #{tpu_custom_call.1} parent=5 // pred_check_branch
        %449 = sbr.rel (%p446) target = $region12
      $region11: #{tpu_custom_call.1} parent=5 // pred_region
        %s450 = ssub.s32 %s36, 1
        // Predicated region
        $region13: #{tpu_custom_call.1} parent=11 // pred_check
          %p451 = pneg %p177
        $region14: #{tpu_custom_call.1} parent=11 // pred_check_branch
          %453 = sbr.rel (%p451) target = $region16
        $region15: #{tpu_custom_call.1} parent=11 // pred_region
          %455 = vsyncadd [#allocation11], 0
          %s456 = sshll.u32 %s4, 4
          %s457 = int_to_ptr.hbm [resolvable:$true] %s456
          %s458 = sshll.u32 [#allocation12], 4
          %s459 = int_to_ptr.vmem [resolvable:$true] %s458
          %464 = dma.hbm_to_vmem [thread:$0]  %s457, 256, %s459, [#allocation11], 64, 64, 4
        $region16: #{tpu_custom_call.1} parent=11 // pred_fallthru
          _
        // Predicated region
        $region17: #{tpu_custom_call.1} parent=11 // pred_check
          %p465 = pneg %p198
        $region18: #{tpu_custom_call.1} parent=11 // pred_check_branch
          %467 = sbr.rel (%p465) target = $region20
        $region19: #{tpu_custom_call.1} parent=11 // pred_region
          _
        $region20: #{tpu_custom_call.1} parent=11 // pred_fallthru
          _
        // Predicated region
        $region21: #{tpu_custom_call.1} parent=11 // pred_check
          %p468 = pneg %p219
        $region22: #{tpu_custom_call.1} parent=11 // pred_check_branch
          %470 = sbr.rel (%p468) target = $region24
        $region23: #{tpu_custom_call.1} parent=11 // pred_region
          %472 = vsyncadd [#allocation14], 0
          %s473 = sshll.u32 %s6, 4
          %s474 = int_to_ptr.hbm [resolvable:$true] %s473
          %s475 = sshll.u32 [#allocation13], 4
          %s476 = int_to_ptr.vmem [resolvable:$true] %s475
          %481 = dma.hbm_to_vmem [thread:$0]  %s474, 256, %s476, [#allocation14], 64, 64, 4
        $region24: #{tpu_custom_call.1} parent=11 // pred_fallthru
          _
        // Predicated region
        $region25: #{tpu_custom_call.1} parent=11 // pred_check
          %p482 = pneg %p240
        $region26: #{tpu_custom_call.1} parent=11 // pred_check_branch
          %484 = sbr.rel (%p482) target = $region28
        $region27: #{tpu_custom_call.1} parent=11 // pred_region
          _
        $region28: #{tpu_custom_call.1} parent=11 // pred_fallthru
          _
        // Predicated region
        $region29: #{tpu_custom_call.1} parent=11 // pred_check
          %p485 = pneg %p261
        $region30: #{tpu_custom_call.1} parent=11 // pred_check_branch
          %487 = sbr.rel (%p485) target = $region32
        $region31: #{tpu_custom_call.1} parent=11 // pred_region
          %489 = vsyncadd [#allocation14], 0
          %s490 = sshll.u32 %s8, 4
          %s491 = int_to_ptr.hbm [resolvable:$true] %s490
          %s492 = sshll.u32 [#allocation15], 4
          %s493 = int_to_ptr.vmem [resolvable:$true] %s492
          %498 = dma.hbm_to_vmem [thread:$0]  %s491, 256, %s493, [#allocation14], 64, 64, 4
        $region32: #{tpu_custom_call.1} parent=11 // pred_fallthru
          _
        // Predicated region
        $region33: #{tpu_custom_call.1} parent=11 // pred_check
          %p499 = pneg %p282
        $region34: #{tpu_custom_call.1} parent=11 // pred_check_branch
          %501 = sbr.rel (%p499) target = $region36
        $region35: #{tpu_custom_call.1} parent=11 // pred_region
          _
        $region36: #{tpu_custom_call.1} parent=11 // pred_fallthru
          _
        // Predicated region
        $region37: #{tpu_custom_call.1} parent=11 // pred_check
          %p502 = pneg %p303
        $region38: #{tpu_custom_call.1} parent=11 // pred_check_branch
          %504 = sbr.rel (%p502) target = $region40
        $region39: #{tpu_custom_call.1} parent=11 // pred_region
          %506 = vsyncadd [#allocation17], 0
          %s507 = sshll.u32 %s10, 4
          %s508 = int_to_ptr.hbm [resolvable:$true] %s507
          %s509 = sshll.u32 [#allocation16], 4
          %s510 = int_to_ptr.vmem [resolvable:$true] %s509
          %515 = dma.hbm_to_vmem [thread:$0]  %s508, 256, %s510, [#allocation17], 64, 64, 4
        $region40: #{tpu_custom_call.1} parent=11 // pred_fallthru
          _
        // Predicated region
        $region41: #{tpu_custom_call.1} parent=11 // pred_check
          %p516 = pneg %p324
        $region42: #{tpu_custom_call.1} parent=11 // pred_check_branch
          %518 = sbr.rel (%p516) target = $region44
        $region43: #{tpu_custom_call.1} parent=11 // pred_region
          _
        $region44: #{tpu_custom_call.1} parent=11 // pred_fallthru
          _
        // Predicated region
        $region45: #{tpu_custom_call.1} parent=11 // pred_check
          %p519 = pneg %p345
        $region46: #{tpu_custom_call.1} parent=11 // pred_check_branch
          %521 = sbr.rel (%p519) target = $region48
        $region47: #{tpu_custom_call.1} parent=11 // pred_region
          %523 = vsyncadd [#allocation17], 0
          %s524 = sshll.u32 %s12, 4
          %s525 = int_to_ptr.hbm [resolvable:$true] %s524
          %s526 = sshll.u32 [#allocation18], 4
          %s527 = int_to_ptr.vmem [resolvable:$true] %s526
          %532 = dma.hbm_to_vmem [thread:$0]  %s525, 256, %s527, [#allocation17], 64, 64, 4
        $region48: #{tpu_custom_call.1} parent=11 // pred_fallthru
          _
        // Predicated region
        $region49: #{tpu_custom_call.1} parent=11 // pred_check
          %p533 = pneg %p366
        $region50: #{tpu_custom_call.1} parent=11 // pred_check_branch
          %535 = sbr.rel (%p533) target = $region52
        $region51: #{tpu_custom_call.1} parent=11 // pred_region
          _
        $region52: #{tpu_custom_call.1} parent=11 // pred_fallthru
          _
        // Predicated region
        $region53: #{tpu_custom_call.1} parent=11 // pred_check
          %p536 = pneg %p387
        $region54: #{tpu_custom_call.1} parent=11 // pred_check_branch
          %538 = sbr.rel (%p536) target = $region56
        $region55: #{tpu_custom_call.1} parent=11 // pred_region
          _
        $region56: #{tpu_custom_call.1} parent=11 // pred_fallthru
          _
        // Predicated region
        $region57: #{tpu_custom_call.1} parent=11 // pred_check
          %p539 = pneg %p408
        $region58: #{tpu_custom_call.1} parent=11 // pred_check_branch
          %541 = sbr.rel (%p539) target = $region60
        $region59: #{tpu_custom_call.1} parent=11 // pred_region
          _
        $region60: #{tpu_custom_call.1} parent=11 // pred_fallthru
          _
      $region12: #{tpu_custom_call.1} parent=5 // pred_fallthru
        _
      %p542 = scmp.lt.s32.totalorder %s36, 2
      // Predicated region
      $region61: #{tpu_custom_call.1} parent=5 // pred_check
        %p543 = pneg %p542
      $region62: #{tpu_custom_call.1} parent=5 // pred_check_branch
        %545 = sbr.rel (%p543) target = $region64
      $region63: #{tpu_custom_call.1} parent=5 // pred_region
        // Predicated region
        $region65: #{tpu_custom_call.1} parent=63 // pred_check
          %p546 = pneg %p70
        $region66: #{tpu_custom_call.1} parent=63 // pred_check_branch
          %548 = sbr.rel (%p546) target = $region68
        $region67: #{tpu_custom_call.1} parent=63 // pred_region
          %s549 = sand.u32 %s60, 1
          %s550 = scalar_lea.sflag [#allocation5], %s549
          %s551 = sand.u32 %s60, 1
          %s552 = smul.addr %s551, 8
          %s553 = scalar_lea.vmem [#allocation4], %s552
          %555 = vsyncadd %s550, 0
          %s556 = sadd.s32 %s44, %s43
          %s557 = smul.addr %s556, 8
          %s558 = scalar_lea.hbm %s0, %s557
          %s560 = sshll.u32 %s558, 4
          %s561 = int_to_ptr.hbm [resolvable:$true] %s560
          %s562 = sshll.u32 %s553, 4
          %s563 = int_to_ptr.vmem [resolvable:$true] %s562
          %565 = dma.hbm_to_vmem [thread:$0]  %s561, 128, %s563, %s550
        $region68: #{tpu_custom_call.1} parent=63 // pred_fallthru
          _
        // Predicated region
        $region69: #{tpu_custom_call.1} parent=63 // pred_check
          %p566 = pneg %p98
        $region70: #{tpu_custom_call.1} parent=63 // pred_check_branch
          %568 = sbr.rel (%p566) target = $region72
        $region71: #{tpu_custom_call.1} parent=63 // pred_region
          %s569 = sand.u32 %s36, 1
          %s570 = scalar_lea.sflag [#allocation8], %s569
          %s571 = sand.u32 %s88, 1
          %s572 = smul.addr %s571, 8
          %s573 = scalar_lea.vmem [#allocation7], %s572
          %575 = vsyncadd %s570, 0
          %s576 = sadd.s32 %s44, %s43
          %s577 = smul.addr %s576, 8
          %s578 = scalar_lea.hbm %s1, %s577
          %s580 = sshll.u32 %s578, 4
          %s581 = int_to_ptr.hbm [resolvable:$true] %s580
          %s582 = sshll.u32 %s573, 4
          %s583 = int_to_ptr.vmem [resolvable:$true] %s582
          %585 = dma.hbm_to_vmem [thread:$0]  %s581, 128, %s583, %s570
        $region72: #{tpu_custom_call.1} parent=63 // pred_fallthru
          _
        // Predicated region
        $region73: #{tpu_custom_call.1} parent=63 // pred_check
          %p586 = pneg %p124
        $region74: #{tpu_custom_call.1} parent=63 // pred_check_branch
          %588 = sbr.rel (%p586) target = $region76
        $region75: #{tpu_custom_call.1} parent=63 // pred_region
          %s589 = sand.u32 %s36, 1
          %s590 = scalar_lea.sflag [#allocation8], %s589
          %s591 = sand.u32 %s114, 1
          %s592 = smul.addr %s591, 16
          %s593 = scalar_lea.vmem [#allocation9], %s592
          %595 = vsyncadd %s590, 0
          %s596 = smul.addr %s43, 2
          %s597 = smul.addr %s596, 8
          %s598 = scalar_lea.hbm %s2, %s597
          %s599 = sshll.u32 %s598, 4
          %s600 = int_to_ptr.hbm [resolvable:$true] %s599
          %s601 = sshll.u32 %s593, 4
          %s602 = int_to_ptr.vmem [resolvable:$true] %s601
          %607 = dma.hbm_to_vmem [thread:$0]  %s600, 256, %s602, %s590, 128, 128, 8
        $region76: #{tpu_custom_call.1} parent=63 // pred_fallthru
          _
        // Predicated region
        $region77: #{tpu_custom_call.1} parent=63 // pred_check
          %p608 = pneg %p150
        $region78: #{tpu_custom_call.1} parent=63 // pred_check_branch
          %610 = sbr.rel (%p608) target = $region80
        $region79: #{tpu_custom_call.1} parent=63 // pred_region
          %s611 = sand.u32 %s36, 1
          %s612 = scalar_lea.sflag [#allocation11], %s611
          %s613 = sand.u32 %s140, 1
          %s614 = smul.addr %s613, 16
          %s615 = scalar_lea.vmem [#allocation10], %s614
          %617 = vsyncadd %s612, 0
          %s618 = smul.addr %s43, 2
          %s619 = smul.addr %s618, 8
          %s620 = scalar_lea.hbm %s3, %s619
          %s621 = sshll.u32 %s620, 4
          %s622 = int_to_ptr.hbm [resolvable:$true] %s621
          %s623 = sshll.u32 %s615, 4
          %s624 = int_to_ptr.vmem [resolvable:$true] %s623
          %629 = dma.hbm_to_vmem [thread:$0]  %s622, 256, %s624, %s612, 128, 128, 8
        $region80: #{tpu_custom_call.1} parent=63 // pred_fallthru
          _
      $region64: #{tpu_custom_call.1} parent=5 // pred_fallthru
        _
      %p630 = scmp.le.s32.totalorder 1, %s36
      %p631 = scmp.lt.s32.totalorder %s36, 3
      %p632 = pnand %p630, %p631
      %p633 = pneg %p632
      // Predicated region
      $region81: #{tpu_custom_call.1} parent=5 // pred_check
        _
      $region82: #{tpu_custom_call.1} parent=5 // pred_check_branch
        %635 = sbr.rel (%p632) target = $region84
      $region83: #{tpu_custom_call.1} parent=5 // pred_region
        %s636 = ssub.s32 %s36, 1
        %s637 = sand.u32 %s63, 1
        %s638 = scalar_lea.sflag [#allocation5], %s637
        %s639 = sand.u32 %s63, 1
        %s640 = smul.addr %s639, 8
        %s641 = scalar_lea.vmem [#allocation4], %s640
        // Predicated region
        $region85: #{tpu_custom_call.1} parent=83 // pred_check
          %p642 = pneg %p76
        $region86: #{tpu_custom_call.1} parent=83 // pred_check_branch
          %644 = sbr.rel (%p642) target = $region88
        $region87: #{tpu_custom_call.1} parent=83 // pred_region
          %646 = dma.done %s638, 128
        $region88: #{tpu_custom_call.1} parent=83 // pred_fallthru
          _
        %s647 = sand.u32 %s41, 1
        %s648 = scalar_lea.sflag [#allocation8], %s647
        %s649 = sand.u32 %s91, 1
        %s650 = smul.addr %s649, 8
        %s651 = scalar_lea.vmem [#allocation7], %s650
        // Predicated region
        $region89: #{tpu_custom_call.1} parent=83 // pred_check
          %p652 = pneg %p104
        $region90: #{tpu_custom_call.1} parent=83 // pred_check_branch
          %654 = sbr.rel (%p652) target = $region92
        $region91: #{tpu_custom_call.1} parent=83 // pred_region
          %656 = dma.done %s648, 128
        $region92: #{tpu_custom_call.1} parent=83 // pred_fallthru
          _
        %s657 = sand.u32 %s41, 1
        %s658 = scalar_lea.sflag [#allocation8], %s657
        %s659 = sand.u32 %s117, 1
        %s660 = smul.addr %s659, 16
        %s661 = scalar_lea.vmem [#allocation9], %s660
        // Predicated region
        $region93: #{tpu_custom_call.1} parent=83 // pred_check
          %p662 = pneg %p130
        $region94: #{tpu_custom_call.1} parent=83 // pred_check_branch
          %664 = sbr.rel (%p662) target = $region96
        $region95: #{tpu_custom_call.1} parent=83 // pred_region
          %666 = dma.done %s658, 256
        $region96: #{tpu_custom_call.1} parent=83 // pred_fallthru
          _
        %s667 = sand.u32 %s41, 1
        %s668 = scalar_lea.sflag [#allocation11], %s667
        %s669 = sand.u32 %s143, 1
        %s670 = smul.addr %s669, 16
        %s671 = scalar_lea.vmem [#allocation10], %s670
        // Predicated region
        $region97: #{tpu_custom_call.1} parent=83 // pred_check
          %p672 = pneg %p156
        $region98: #{tpu_custom_call.1} parent=83 // pred_check_branch
          %674 = sbr.rel (%p672) target = $region100
        $region99: #{tpu_custom_call.1} parent=83 // pred_region
          %676 = dma.done %s668, 256
        $region100: #{tpu_custom_call.1} parent=83 // pred_fallthru
          _
        // Predicated region
        $region101: #{tpu_custom_call.1} parent=83 // pred_check
          %p677 = pneg %p177
        $region102: #{tpu_custom_call.1} parent=83 // pred_check_branch
          %679 = sbr.rel (%p677) target = $region104
        $region103: #{tpu_custom_call.1} parent=83 // pred_region
          %681 = dma.done [#allocation11], 256
        $region104: #{tpu_custom_call.1} parent=83 // pred_fallthru
          _
        // Predicated region
        $region105: #{tpu_custom_call.1} parent=83 // pred_check
          %p682 = pneg %p219
        $region106: #{tpu_custom_call.1} parent=83 // pred_check_branch
          %684 = sbr.rel (%p682) target = $region108
        $region107: #{tpu_custom_call.1} parent=83 // pred_region
          %686 = dma.done [#allocation14], 256
        $region108: #{tpu_custom_call.1} parent=83 // pred_fallthru
          _
        // Predicated region
        $region109: #{tpu_custom_call.1} parent=83 // pred_check
          %p687 = pneg %p261
        $region110: #{tpu_custom_call.1} parent=83 // pred_check_branch
          %689 = sbr.rel (%p687) target = $region112
        $region111: #{tpu_custom_call.1} parent=83 // pred_region
          %691 = dma.done [#allocation14], 256
        $region112: #{tpu_custom_call.1} parent=83 // pred_fallthru
          _
        // Predicated region
        $region113: #{tpu_custom_call.1} parent=83 // pred_check
          %p692 = pneg %p303
        $region114: #{tpu_custom_call.1} parent=83 // pred_check_branch
          %694 = sbr.rel (%p692) target = $region116
        $region115: #{tpu_custom_call.1} parent=83 // pred_region
          %696 = dma.done [#allocation17], 256
        $region116: #{tpu_custom_call.1} parent=83 // pred_fallthru
          _
        // Predicated region
        $region117: #{tpu_custom_call.1} parent=83 // pred_check
          %p697 = pneg %p345
        $region118: #{tpu_custom_call.1} parent=83 // pred_check_branch
          %699 = sbr.rel (%p697) target = $region120
        $region119: #{tpu_custom_call.1} parent=83 // pred_region
          %701 = dma.done [#allocation17], 256
        $region120: #{tpu_custom_call.1} parent=83 // pred_fallthru
          _
        %s702 = sand.u32 %s63, 1
        %s703 = scalar_lea.sflag [#allocation5], %s702
        %s704 = sand.u32 %s63, 1
        %s705 = smul.addr %s704, 8
        %s706 = scalar_lea.vmem [#allocation4], %s705
        %p707 = pneg %p76
        %p708 = pneg %p73
        %s709 = sand.u32 %s41, 1
        %s710 = scalar_lea.sflag [#allocation8], %s709
        %s711 = sand.u32 %s91, 1
        %s712 = smul.addr %s711, 8
        %s713 = scalar_lea.vmem [#allocation7], %s712
        %p714 = pneg %p104
        %p715 = pneg %p101
        %s716 = sand.u32 %s41, 1
        %s717 = scalar_lea.sflag [#allocation8], %s716
        %s718 = sand.u32 %s117, 1
        %s719 = smul.addr %s718, 16
        %s720 = scalar_lea.vmem [#allocation9], %s719
        %p721 = pneg %p130
        %p722 = pneg %p127
        %s723 = sand.u32 %s41, 1
        %s724 = scalar_lea.sflag [#allocation11], %s723
        %s725 = sand.u32 %s143, 1
        %s726 = smul.addr %s725, 16
        %s727 = scalar_lea.vmem [#allocation10], %s726
        %p728 = pneg %p156
        %p729 = pneg %p153
        %p730 = pneg %p177
        %p731 = pneg %p174
        %p732 = pneg %p198
        %p733 = pneg %p195
        %p734 = pneg %p219
        %p735 = pneg %p216
        %p736 = pneg %p240
        %p737 = pneg %p237
        %p738 = pneg %p261
        %p739 = pneg %p258
        %p740 = pneg %p282
        %p741 = pneg %p279
        %p742 = pneg %p303
        %p743 = pneg %p300
        %p744 = pneg %p324
        %p745 = pneg %p321
        %p746 = pneg %p345
        %p747 = pneg %p342
        %p748 = pneg %p366
        %p749 = pneg %p363
        %p750 = pneg %p387
        %p751 = pneg %p384
        %p752 = pneg %p408
        %p753 = pneg %p405
        %p754 = pneg %p436
        %p755 = pneg %p433
        %s756 = sand.u32 %s423, 1
        %s757 = scalar_lea.sflag [#allocation6], %s756
        %s758 = sand.u32 %s423, 1
        %s759 = smul.addr %s758, 8
        %s760 = scalar_lea.vmem [#allocation19], %s759
        %p762 = scmp.eq.s32.totalorder %s46, 0
        // Predicated region
        $region121: #{tpu_custom_call.1} parent=83 // pred_check
          %p763 = pneg %p762
        $region122: #{tpu_custom_call.1} parent=83 // pred_check_branch
          %765 = sbr.rel (%p763) target = $region124
        $region123: #{tpu_custom_call.1} parent=83 // pred_region
          %v766 = vld [vmem:[%s661] sm:$0xff]
          %v767 = vld [vmem:[%s661 + $0x8] sm:$0xff]
          %v768 = vld [vmem:[%s671] sm:$0xff]
          %v769 = vld [vmem:[%s671 + $0x8] sm:$0xff]
          %v770 = vadd.f32 %v766, %v768
          %v771 = vadd.f32 %v767, %v769
          %v772 = vpack.c.bf16 %v771, %v770
          %v773 = vld [vmem:[#allocation13] sm:$0xf]
          %v774 = vld [vmem:[#allocation13 + $0x4] sm:$0xf]
          %v775 = vld [vmem:[#allocation13 + $0x8] sm:$0xf]
          %v776 = vld [vmem:[#allocation13 + $0xc] sm:$0xf]
          %v777 = vld [vmem:[%s7] sm:$0x1]
          %v779 = vperm.slane %v777, 0
          %v785 = vunpack.c.l.b16 %v773
          %v786 = vunpack.c.l.b16 %v774
          %v787 = vunpack.c.l.b16 %v775
          %v788 = vunpack.c.l.b16 %v776
          %v789 = vpack.c.b16 %v786, %v785
          %v790 = vpack.c.b16 %v788, %v787
          %vm793 = vcmask 261120
          %v795 = vsel %vm793, %v772, 0
          %797 = vmatpush.bf16.msra.mxu0 0
          %798 = vmatpush.bf16.msra.mxu0 0
          %799 = vmatpush.bf16.msra.mxu0 0
          %800 = vmatpush.bf16.msra.mxu0 0
          %801 = vmatpush.bf16.msra.mxu0 0
          %802 = vmatpush.bf16.msra.mxu0 0
          %803 = vmatpush.bf16.msra.mxu0 %v790
          %804 = vmatpush.bf16.msra.mxu0 %v789
          %805 = vmatmul.bf16.gmra.mxu0 %v795
          %v806 = vpop.f32.mrf.mxu0
          %v807 = vadd.f32 %v779, %v806
          %v808 = vpop.f32.mrf.mxu0
          %v809 = vadd.f32 %v779, %v808
          %810 = vdwg.mxu0
          %v811 = vpack.c.bf16 %v767, %v766
          %v812 = vld [vmem:[#allocation15] sm:$0xf]
          %v813 = vld [vmem:[#allocation15 + $0x4] sm:$0xf]
          %v814 = vld [vmem:[#allocation15 + $0x8] sm:$0xf]
          %v815 = vld [vmem:[#allocation15 + $0xc] sm:$0xf]
          %v816 = vld [vmem:[%s9] sm:$0x1]
          %v818 = vperm.slane %v816, 0
          %v824 = vunpack.c.l.b16 %v812
          %v825 = vunpack.c.l.b16 %v813
          %v826 = vunpack.c.l.b16 %v814
          %v827 = vunpack.c.l.b16 %v815
          %v828 = vpack.c.b16 %v825, %v824
          %v829 = vpack.c.b16 %v827, %v826
          %v833 = vsel %vm793, %v811, 0
          %835 = vmatpush.bf16.msra.mxu0 0
          %836 = vmatpush.bf16.msra.mxu0 0
          %837 = vmatpush.bf16.msra.mxu0 0
          %838 = vmatpush.bf16.msra.mxu0 0
          %839 = vmatpush.bf16.msra.mxu0 0
          %840 = vmatpush.bf16.msra.mxu0 0
          %841 = vmatpush.bf16.msra.mxu0 %v829
          %842 = vmatpush.bf16.msra.mxu0 %v828
          %843 = vmatmul.bf16.gmra.mxu0 %v833
          %v844 = vpop.f32.mrf.mxu0
          %v845 = vadd.f32 %v818, %v844
          %v846 = vpop.f32.mrf.mxu0
          %v847 = vadd.f32 %v818, %v846
          %848 = vdwg.mxu0
          %v849 = vpack.c.bf16 %v807, %v807
          %v850 = vpack.c.bf16 %v809, %v809
          %vm851 = vcmask 257024
          %852 = vst.msk [vmem:[#allocation2] sm:$0xf] %vm851, %v849
          %853 = vst.msk [vmem:[#allocation2 + $0x4] sm:$0xf] %vm851, %v850
          %v854 = vpack.c.bf16 %v845, %v845
          %v855 = vpack.c.bf16 %v847, %v847
          %856 = vst.msk [vmem:[#allocation3] sm:$0xf] %vm851, %v854
          %857 = vst.msk [vmem:[#allocation3 + $0x4] sm:$0xf] %vm851, %v855
        $region124: #{tpu_custom_call.1} parent=83 // pred_fallthru
          _
        %v858 = vld [vmem:[%s641] sm:$0xff]
        %v859 = vld [vmem:[%s651] sm:$0xff]
        %v860 = vadd.f32 %v858, %v859
        %v861 = vpack.c.bf16 %v860, %v860
        %v862 = vld [vmem:[#allocation12] sm:$0xf]
        %v863 = vld [vmem:[#allocation12 + $0x4] sm:$0xf]
        %v864 = vld [vmem:[#allocation12 + $0x8] sm:$0xf]
        %v865 = vld [vmem:[#allocation12 + $0xc] sm:$0xf]
        %v866 = vld [vmem:[%s5] sm:$0x1]
        %v868 = vperm.slane %v866, 0
        %v874 = vunpack.c.l.b16 %v862
        %v875 = vunpack.c.l.b16 %v863
        %v876 = vunpack.c.l.b16 %v864
        %v877 = vunpack.c.l.b16 %v865
        %v878 = vpack.c.b16 %v875, %v874
        %v879 = vpack.c.b16 %v877, %v876
        %vm882 = vcmask 261120
        %v884 = vsel %vm882, %v861, 0
        %886 = vmatpush.bf16.msra.mxu0 0
        %887 = vmatpush.bf16.msra.mxu0 0
        %888 = vmatpush.bf16.msra.mxu0 0
        %889 = vmatpush.bf16.msra.mxu0 0
        %890 = vmatpush.bf16.msra.mxu0 0
        %891 = vmatpush.bf16.msra.mxu0 0
        %892 = vmatpush.bf16.msra.mxu0 %v879
        %893 = vmatpush.bf16.msra.mxu0 %v878
        %894 = vmatmul.bf16.gmra.mxu0 %v884
        %v895 = vpop.f32.mrf.mxu0
        %v896 = vadd.f32 %v868, %v895
        %v897 = vpop.f32.mrf.mxu0
        %898 = vdwg.mxu0
        %v899 = vmul.f32 %v896, 0.35355338
        %v900 = vpack.c.bf16 %v899, %v899
        %v901 = vld [vmem:[#allocation2] sm:$0xf]
        %v902 = vld [vmem:[#allocation2 + $0x4] sm:$0xf]
        %v903 = vld [vmem:[#allocation3] sm:$0xf]
        %v904 = vld [vmem:[#allocation3 + $0x4] sm:$0xf]
        %v907 = vunpack.c.l.b16 %v901
        %v908 = vunpack.c.l.b16 %v902
        %v909 = vpack.c.b16 %v908, %v907
        %vm910 = vcmask 64512
        %v912 = vsel %vm910, %v900, 0
        %v915 = vsel %vm910, %v909, 0
        %917 = vmatpush.bf16.xpose.msra.mxu0 0
        %918 = vmatpush.bf16.xpose.msra.mxu0 0
        %919 = vmatpush.bf16.xpose.msra.mxu0 0
        %920 = vmatpush.bf16.xpose.msra.mxu0 0
        %921 = vmatpush.bf16.xpose.msra.mxu0 0
        %922 = vmatpush.bf16.xpose.msra.mxu0 0
        %923 = vmatpush.bf16.xpose.msra.mxu0 0
        %924 = vmatpush.bf16.xpose.msra.mxu0 %v915
        %925 = vmatmul.bf16.gmra.mxu0 %v912
        %v926 = vpop.f32.mrf.mxu0
        %v927 = vadd.f32 0.0, %v926
        %v928 = vpop.f32.mrf.mxu0
        %929 = vdwg.mxu0
        %vm930 = vcmask 130048
        %v931 = vsel %vm930, %v927, -inf
        %932 = vmax.xlane.f32.xlu0 %v931
        %v933 = vpop.xlane.xlu0 %932
        %v934 = vsub.f32 %v927, %v933
        %v935 = vmul.f32 %v934, 1.442695
        %v936 = vpow.pop %v935
        %v937 = vsel %vm930, %v936, 0.0
        %938 = vadd.xlane.f32.xlu0 %v937
        %v939 = vpop.xlane.xlu0 %938
        %v940 = vpack.c.bf16 %v936, %v936
        %v943 = vunpack.c.l.b16 %v903
        %v944 = vunpack.c.l.b16 %v904
        %v945 = vpack.c.b16 %v944, %v943
        %v948 = vsel %vm930, %v940, 0
        %950 = vmatpush.bf16.msra.mxu0 0
        %951 = vmatpush.bf16.msra.mxu0 0
        %952 = vmatpush.bf16.msra.mxu0 0
        %953 = vmatpush.bf16.msra.mxu0 0
        %954 = vmatpush.bf16.msra.mxu0 0
        %955 = vmatpush.bf16.msra.mxu0 0
        %956 = vmatpush.bf16.msra.mxu0 0
        %957 = vmatpush.bf16.msra.mxu0 %v945
        %958 = vmatmul.bf16.gmra.mxu0 %v948
        %v959 = vpop.f32.mrf.mxu0
        %v960 = vadd.f32 0.0, %v959
        %v961 = vpop.f32.mrf.mxu0
        %962 = vdwg.mxu0
        %v963 = vrcp.pop %v939
        %v964 = vmul.f32 %v960, %v963
        %v966 = vunpack.c.l.b16 %v900
        %v967 = vpack.c.b16 %v966, %v966
        %968 = vrot.lane.b32.xlu0 %v967, 120
        %v969 = vpop.permute.xlu0 %968
        %970 = vrot.lane.b32.xlu0 %v909, 120
        %v971 = vpop.permute.xlu0 %970
        %v973 = vsel %vm910, %v969, 0
        %v976 = vsel %vm910, %v971, 0
        %978 = vmatpush.bf16.xpose.msra.mxu0 0
        %979 = vmatpush.bf16.xpose.msra.mxu0 0
        %980 = vmatpush.bf16.xpose.msra.mxu0 0
        %981 = vmatpush.bf16.xpose.msra.mxu0 0
        %982 = vmatpush.bf16.xpose.msra.mxu0 0
        %983 = vmatpush.bf16.xpose.msra.mxu0 0
        %984 = vmatpush.bf16.xpose.msra.mxu0 0
        %985 = vmatpush.bf16.xpose.msra.mxu0 %v976
        %986 = vmatmul.bf16.gmra.mxu0 %v973
        %v987 = vpop.f32.mrf.mxu0
        %v988 = vadd.f32 0.0, %v987
        %v989 = vpop.f32.mrf.mxu0
        %990 = vdwg.mxu0
        %v991 = vsel %vm930, %v988, -inf
        %992 = vmax.xlane.f32.xlu0 %v991
        %v993 = vpop.xlane.xlu0 %992
        %v994 = vsub.f32 %v988, %v993
        %v995 = vmul.f32 %v994, 1.442695
        %v996 = vpow.pop %v995
        %v997 = vsel %vm930, %v996, 0.0
        %998 = vadd.xlane.f32.xlu0 %v997
        %v999 = vpop.xlane.xlu0 %998
        %v1000 = vpack.c.bf16 %v996, %v996
        %1001 = vrot.lane.b32.xlu0 %v945, 120
        %v1002 = vpop.permute.xlu0 %1001
        %v1005 = vsel %vm930, %v1000, 0
        %1007 = vmatpush.bf16.msra.mxu0 0
        %1008 = vmatpush.bf16.msra.mxu0 0
        %1009 = vmatpush.bf16.msra.mxu0 0
        %1010 = vmatpush.bf16.msra.mxu0 0
        %1011 = vmatpush.bf16.msra.mxu0 0
        %1012 = vmatpush.bf16.msra.mxu0 0
        %1013 = vmatpush.bf16.msra.mxu0 0
        %1014 = vmatpush.bf16.msra.mxu0 %v1002
        %1015 = vmatmul.bf16.gmra.mxu0 %v1005
        %v1016 = vpop.f32.mrf.mxu0
        %v1017 = vadd.f32 0.0, %v1016
        %v1018 = vpop.f32.mrf.mxu0
        %1019 = vdwg.mxu0
        %v1020 = vrcp.pop %v999
        %v1021 = vmul.f32 %v1017, %v1020
        %1022 = vrot.lane.b32.xlu0 %v967, 112
        %v1023 = vpop.permute.xlu0 %1022
        %1024 = vrot.lane.b32.xlu0 %v909, 112
        %v1025 = vpop.permute.xlu0 %1024
        %v1027 = vsel %vm910, %v1023, 0
        %v1030 = vsel %vm910, %v1025, 0
        %1032 = vmatpush.bf16.xpose.msra.mxu0 0
        %1033 = vmatpush.bf16.xpose.msra.mxu0 0
        %1034 = vmatpush.bf16.xpose.msra.mxu0 0
        %1035 = vmatpush.bf16.xpose.msra.mxu0 0
        %1036 = vmatpush.bf16.xpose.msra.mxu0 0
        %1037 = vmatpush.bf16.xpose.msra.mxu0 0
        %1038 = vmatpush.bf16.xpose.msra.mxu0 0
        %1039 = vmatpush.bf16.xpose.msra.mxu0 %v1030
        %1040 = vmatmul.bf16.gmra.mxu0 %v1027
        %v1041 = vpop.f32.mrf.mxu0
        %v1042 = vadd.f32 0.0, %v1041
        %v1043 = vpop.f32.mrf.mxu0
        %1044 = vdwg.mxu0
        %v1045 = vsel %vm930, %v1042, -inf
        %1046 = vmax.xlane.f32.xlu0 %v1045
        %v1047 = vpop.xlane.xlu0 %1046
        %v1048 = vsub.f32 %v1042, %v1047
        %v1049 = vmul.f32 %v1048, 1.442695
        %v1050 = vpow.pop %v1049
        %v1051 = vsel %vm930, %v1050, 0.0
        %1052 = vadd.xlane.f32.xlu0 %v1051
        %v1053 = vpop.xlane.xlu0 %1052
        %v1054 = vpack.c.bf16 %v1050, %v1050
        %1055 = vrot.lane.b32.xlu0 %v945, 112
        %v1056 = vpop.permute.xlu0 %1055
        %v1059 = vsel %vm930, %v1054, 0
        %1061 = vmatpush.bf16.msra.mxu0 0
        %1062 = vmatpush.bf16.msra.mxu0 0
        %1063 = vmatpush.bf16.msra.mxu0 0
        %1064 = vmatpush.bf16.msra.mxu0 0
        %1065 = vmatpush.bf16.msra.mxu0 0
        %1066 = vmatpush.bf16.msra.mxu0 0
        %1067 = vmatpush.bf16.msra.mxu0 0
        %1068 = vmatpush.bf16.msra.mxu0 %v1056
        %1069 = vmatmul.bf16.gmra.mxu0 %v1059
        %v1070 = vpop.f32.mrf.mxu0
        %v1071 = vadd.f32 0.0, %v1070
        %v1072 = vpop.f32.mrf.mxu0
        %1073 = vdwg.mxu0
        %v1074 = vrcp.pop %v1053
        %v1075 = vmul.f32 %v1071, %v1074
        %1076 = vrot.lane.b32.xlu0 %v967, 104
        %v1077 = vpop.permute.xlu0 %1076
        %1078 = vrot.lane.b32.xlu0 %v909, 104
        %v1079 = vpop.permute.xlu0 %1078
        %v1081 = vsel %vm910, %v1077, 0
        %v1084 = vsel %vm910, %v1079, 0
        %1086 = vmatpush.bf16.xpose.msra.mxu0 0
        %1087 = vmatpush.bf16.xpose.msra.mxu0 0
        %1088 = vmatpush.bf16.xpose.msra.mxu0 0
        %1089 = vmatpush.bf16.xpose.msra.mxu0 0
        %1090 = vmatpush.bf16.xpose.msra.mxu0 0
        %1091 = vmatpush.bf16.xpose.msra.mxu0 0
        %1092 = vmatpush.bf16.xpose.msra.mxu0 0
        %1093 = vmatpush.bf16.xpose.msra.mxu0 %v1084
        %1094 = vmatmul.bf16.gmra.mxu0 %v1081
        %v1095 = vpop.f32.mrf.mxu0
        %v1096 = vadd.f32 0.0, %v1095
        %v1097 = vpop.f32.mrf.mxu0
        %1098 = vdwg.mxu0
        %v1099 = vsel %vm930, %v1096, -inf
        %1100 = vmax.xlane.f32.xlu0 %v1099
        %v1101 = vpop.xlane.xlu0 %1100
        %v1102 = vsub.f32 %v1096, %v1101
        %v1103 = vmul.f32 %v1102, 1.442695
        %v1104 = vpow.pop %v1103
        %v1105 = vsel %vm930, %v1104, 0.0
        %1106 = vadd.xlane.f32.xlu0 %v1105
        %v1107 = vpop.xlane.xlu0 %1106
        %v1108 = vpack.c.bf16 %v1104, %v1104
        %1109 = vrot.lane.b32.xlu0 %v945, 104
        %v1110 = vpop.permute.xlu0 %1109
        %v1113 = vsel %vm930, %v1108, 0
        %1115 = vmatpush.bf16.msra.mxu0 0
        %1116 = vmatpush.bf16.msra.mxu0 0
        %1117 = vmatpush.bf16.msra.mxu0 0
        %1118 = vmatpush.bf16.msra.mxu0 0
        %1119 = vmatpush.bf16.msra.mxu0 0
        %1120 = vmatpush.bf16.msra.mxu0 0
        %1121 = vmatpush.bf16.msra.mxu0 0
        %1122 = vmatpush.bf16.msra.mxu0 %v1110
        %1123 = vmatmul.bf16.gmra.mxu0 %v1113
        %v1124 = vpop.f32.mrf.mxu0
        %v1125 = vadd.f32 0.0, %v1124
        %v1126 = vpop.f32.mrf.mxu0
        %1127 = vdwg.mxu0
        %v1128 = vrcp.pop %v1107
        %v1129 = vmul.f32 %v1125, %v1128
        %1131 = vrot.lane.b32.xlu0 %v1021, 8
        %v1132 = vpop.permute.xlu0 %1131
        %1135 = vrot.lane.b32.xlu0 %v1075, 16
        %v1136 = vpop.permute.xlu0 %1135
        %1139 = vrot.lane.b32.xlu0 %v1129, 24
        %v1140 = vpop.permute.xlu0 %1139
        %v1142 = vsel %vm910, %v964, %v1132
        %v1143 = vsel %vm930, %v1142, %v1136
        %vm1144 = vcmask 195584
        %v1145 = vsel %vm1144, %v1143, %v1140
        %v1146 = vpack.c.bf16 %v1145, %v1145
        %v1147 = vld [vmem:[#allocation16] sm:$0xf]
        %v1148 = vld [vmem:[#allocation16 + $0x4] sm:$0xf]
        %v1149 = vld [vmem:[#allocation16 + $0x8] sm:$0xf]
        %v1150 = vld [vmem:[#allocation16 + $0xc] sm:$0xf]
        %v1151 = vld [vmem:[%s11] sm:$0x1]
        %v1153 = vperm.slane %v1151, 0
        %v1159 = vunpack.c.l.b16 %v1147
        %v1160 = vunpack.c.l.b16 %v1148
        %v1161 = vunpack.c.l.b16 %v1149
        %v1162 = vunpack.c.l.b16 %v1150
        %v1163 = vpack.c.b16 %v1160, %v1159
        %v1164 = vpack.c.b16 %v1162, %v1161
        %v1168 = vsel %vm882, %v1146, 0
        %1170 = vmatpush.bf16.msra.mxu0 0
        %1171 = vmatpush.bf16.msra.mxu0 0
        %1172 = vmatpush.bf16.msra.mxu0 0
        %1173 = vmatpush.bf16.msra.mxu0 0
        %1174 = vmatpush.bf16.msra.mxu0 0
        %1175 = vmatpush.bf16.msra.mxu0 0
        %1176 = vmatpush.bf16.msra.mxu0 %v1164
        %1177 = vmatpush.bf16.msra.mxu0 %v1163
        %1178 = vmatmul.bf16.gmra.mxu0 %v1168
        %v1179 = vpop.f32.mrf.mxu0
        %v1180 = vadd.f32 %v1153, %v1179
        %v1181 = vpop.f32.mrf.mxu0
        %1182 = vdwg.mxu0
        %v1183 = vpack.c.bf16 %v1180, %v1180
        %v1184 = vld [vmem:[#allocation18] sm:$0xf]
        %v1185 = vld [vmem:[#allocation18 + $0x4] sm:$0xf]
        %v1186 = vld [vmem:[#allocation18 + $0x8] sm:$0xf]
        %v1187 = vld [vmem:[#allocation18 + $0xc] sm:$0xf]
        %v1188 = vld [vmem:[%s13] sm:$0x1]
        %v1190 = vperm.slane %v1188, 0
        %v1196 = vunpack.c.l.b16 %v1184
        %v1197 = vunpack.c.l.b16 %v1185
        %v1198 = vunpack.c.l.b16 %v1186
        %v1199 = vunpack.c.l.b16 %v1187
        %v1200 = vpack.c.b16 %v1197, %v1196
        %v1201 = vpack.c.b16 %v1199, %v1198
        %v1205 = vsel %vm882, %v1183, 0
        %1207 = vmatpush.bf16.msra.mxu0 0
        %1208 = vmatpush.bf16.msra.mxu0 0
        %1209 = vmatpush.bf16.msra.mxu0 0
        %1210 = vmatpush.bf16.msra.mxu0 0
        %1211 = vmatpush.bf16.msra.mxu0 0
        %1212 = vmatpush.bf16.msra.mxu0 0
        %1213 = vmatpush.bf16.msra.mxu0 %v1201
        %1214 = vmatpush.bf16.msra.mxu0 %v1200
        %1215 = vmatmul.bf16.gmra.mxu0 %v1205
        %v1216 = vpop.f32.mrf.mxu0
        %v1217 = vadd.f32 %v1190, %v1216
        %v1218 = vpop.f32.mrf.mxu0
        %1219 = vdwg.mxu0
        %v1220 = vadd.f32 %v858, %v1217
        %v1221 = vsel %vm882, %v1220, 0.0
        %1222 = vadd.xlane.f32.xlu0 %v1221
        %v1223 = vpop.xlane.xlu0 %1222
        %v1224 = vrcp.pop 32.0
        %v1225 = vmul.f32 32.0, %v1224
        %v1226 = vsub.f32 1.0, %v1225
        %v1227 = vmul.f32 %v1224, %v1226
        %v1228 = vadd.f32 %v1224, %v1227
        %vm1229 = vweird.f32 %v1224
        %v1230 = vsel %vm1229, %v1224, %v1228
        %v1231 = vmul.f32 %v1223, %v1230
        %v1232 = vsub.f32 %v1220, %v1231
        %v1233 = vmul.f32 %v1232, %v1232
        %v1234 = vsel %vm882, %v1233, 0.0
        %1235 = vadd.xlane.f32.xlu0 %v1234
        %v1236 = vpop.xlane.xlu0 %1235
        %v1237 = vmul.f32 %v1236, %v1230
        %v1238 = vadd.f32 %v1237, 1e-05
        %v1239 = vrsqrt.pop %v1238
        %v1240 = vmul.f32 %v1239, %v1238
        %v1241 = vmul.f32 %v1240, %v1239
        %v1242 = vmul.f32 0.5, %v1241
        %v1243 = vsub.f32 1.5, %v1242
        %v1244 = vmul.f32 %v1239, %v1243
        %vm1245 = vweird.f32 %v1238
        %vm1246 = vweird.f32 %v1239
        %vm1247 = vmor %vm1245, %vm1246
        %v1248 = vsel %vm1247, %v1239, %v1244
        %v1249 = vmul.f32 %v1232, %v1248
        %v1250 = vld [vmem:[%s14] sm:$0x1]
        %v1252 = vperm.slane %v1250, 0
        %v1254 = vmul.f32 %v1249, %v1252
        %v1255 = vld [vmem:[%s15] sm:$0x1]
        %v1257 = vperm.slane %v1255, 0
        %v1259 = vadd.f32 %v1254, %v1257
        %1260 = vst.msk [vmem:[%s760] sm:$0xff] %vm882, %v1259
        %s1261 = sand.u32 %s423, 1
        %s1262 = scalar_lea.sflag [#allocation6], %s1261
        %s1263 = sand.u32 %s423, 1
        %s1264 = smul.addr %s1263, 8
        %s1265 = scalar_lea.vmem [#allocation19], %s1264
        // Predicated region
        $region125: #{tpu_custom_call.1} parent=83 // pred_check
          %p1266 = pneg %p433
        $region126: #{tpu_custom_call.1} parent=83 // pred_check_branch
          %1268 = sbr.rel (%p1266) target = $region128
        $region127: #{tpu_custom_call.1} parent=83 // pred_region
          %1270 = vsyncadd %s1262, 0
          %s1271 = sadd.s32 %s46, %s45
          %s1272 = smul.addr %s1271, 8
          %s1273 = scalar_lea.hbm %s16, %s1272
          %s1275 = sshll.u32 %s1265, 4
          %s1276 = int_to_ptr.vmem [resolvable:$true] %s1275
          %s1277 = sshll.u32 %s1273, 4
          %s1278 = int_to_ptr.hbm [resolvable:$true] %s1277
          %1280 = dma.vmem_to_hbm [thread:$0]  %s1276, 128, %s1278, %s1262
        $region128: #{tpu_custom_call.1} parent=83 // pred_fallthru
          _
      $region84: #{tpu_custom_call.1} parent=5 // pred_fallthru
        _
      %p1281 = scmp.le.s32.totalorder 2, %s36
      // Predicated region
      $region129: #{tpu_custom_call.1} parent=5 // pred_check
        %p1282 = pneg %p1281
      $region130: #{tpu_custom_call.1} parent=5 // pred_check_branch
        %1284 = sbr.rel (%p1282) target = $region132
      $region131: #{tpu_custom_call.1} parent=5 // pred_region
        %s1285 = ssub.s32 %s36, 2
        // Predicated region
        $region133: #{tpu_custom_call.1} parent=131 // pred_check
          %p1286 = pneg %p439
        $region134: #{tpu_custom_call.1} parent=131 // pred_check_branch
          %1288 = sbr.rel (%p1286) target = $region136
        $region135: #{tpu_custom_call.1} parent=131 // pred_region
          %s1289 = sand.u32 %s424, 1
          %s1290 = scalar_lea.sflag [#allocation6], %s1289
          %s1291 = sand.u32 %s424, 1
          %s1292 = smul.addr %s1291, 8
          %s1293 = scalar_lea.vmem [#allocation19], %s1292
          %1295 = dma.done %s1290, 128
        $region136: #{tpu_custom_call.1} parent=131 // pred_fallthru
          _
      $region132: #{tpu_custom_call.1} parent=5 // pred_fallthru
        _
    $region6: #{tpu_custom_call.1} parent=1 // loop_footer
      %s40 = sadd.s32 1, %s36
    $region7: #{tpu_custom_call.1} parent=1 // loop_footer_branch
      %35 = sbr.rel target = $region3
    $region8: #{tpu_custom_call.1} parent=1 // loop_exit
      _
    %1296 = vsyncpa [#allocation5], 1
    %s1297 = scalar_lea.sflag [#allocation5], 1
    %1298 = vsyncpa %s1297, 1
    %1299 = vsyncpa [#allocation8], 1
    %s1300 = scalar_lea.sflag [#allocation8], 1
    %1301 = vsyncpa %s1300, 1
    %1302 = vsyncpa [#allocation11], 1
    %s1303 = scalar_lea.sflag [#allocation11], 1
    %1304 = vsyncpa %s1303, 1
    %1305 = vsyncpa [#allocation14], 1
    %1306 = vsyncpa [#allocation17], 1
    %1307 = vsyncpa [#allocation6], 1
    %s1308 = scalar_lea.sflag [#allocation6], 1
    %1309 = vsyncpa %s1308, 1

</llo_original>
